<compile_context>
chip_gen: v5e
topology: v5e:2x2
jax: 0.10.0
libtpu: 0.0.40
codegen_flags: <defaults>
</compile_context>

<pallas_src>
import numpy as np
import jax
import jax.numpy as jnp
from jax.experimental import pallas as pl
from jax.experimental.pallas import tpu as pltpu


# ---------------------------------------------------------------------------
# Host-side numpy utilities (mirror the original `utils.*` helpers).
# ---------------------------------------------------------------------------
def generate_anchor(base_size=16, ratios=(0.5, 1.0, 2.0), scales=(8, 16, 32),
                    strides=16):
    del strides
    cx = cy = base_size / 2.0
    anchors = np.zeros((len(ratios) * len(scales), 4), dtype=np.float32)
    for i, r in enumerate(ratios):
        for j, s in enumerate(scales):
            h = base_size * s * np.sqrt(r)
            w = base_size * s * np.sqrt(1.0 / r)
            k = i * len(scales) + j
            anchors[k] = [cx - w / 2.0, cy - h / 2.0, cx + w / 2.0, cy + h / 2.0]
    return anchors


def get_anchor(anchor_base, stride, h, w):
    shift_x = np.arange(w) * stride
    shift_y = np.arange(h) * stride
    sx, sy = np.meshgrid(shift_x, shift_y)
    shifts = np.stack([sx.ravel(), sy.ravel(), sx.ravel(), sy.ravel()], axis=1)
    anchors = anchor_base[None, :, :] + shifts[:, None, :]
    return anchors.reshape(-1, 4).astype(np.float32)          # (h*w*A, 4)


def transform_locs(anchors, locs):
    widths = anchors[:, 2] - anchors[:, 0]
    heights = anchors[:, 3] - anchors[:, 1]
    ctr_x = anchors[:, 0] + 0.5 * widths
    ctr_y = anchors[:, 1] + 0.5 * heights
    dx, dy, dw, dh = locs[:, 0], locs[:, 1], locs[:, 2], locs[:, 3]
    pred_cx = dx * widths + ctr_x
    pred_cy = dy * heights + ctr_y
    pred_w = np.exp(dw) * widths
    pred_h = np.exp(dh) * heights
    boxes = np.zeros_like(anchors)
    boxes[:, 0] = pred_cx - 0.5 * pred_w
    boxes[:, 1] = pred_cy - 0.5 * pred_h
    boxes[:, 2] = pred_cx + 0.5 * pred_w
    boxes[:, 3] = pred_cy + 0.5 * pred_h
    return boxes


def nms(boxes, thresh):
    x1, y1, x2, y2 = boxes[:, 0], boxes[:, 1], boxes[:, 2], boxes[:, 3]
    areas = (x2 - x1) * (y2 - y1)
    order = np.arange(boxes.shape[0])
    keep = []
    while order.size > 0:
        i = order[0]
        keep.append(i)
        xx1 = np.maximum(x1[i], x1[order[1:]])
        yy1 = np.maximum(y1[i], y1[order[1:]])
        xx2 = np.minimum(x2[i], x2[order[1:]])
        yy2 = np.minimum(y2[i], y2[order[1:]])
        w = np.maximum(0.0, xx2 - xx1)
        h = np.maximum(0.0, yy2 - yy1)
        inter = w * h
        iou = inter / (areas[i] + areas[order[1:]] - inter + 1e-9)
        order = order[1:][iou <= thresh]
    return np.asarray(keep, dtype=np.int64)


# ---------------------------------------------------------------------------
# Pallas kernel: fused conv3x3(pad=1) + ReLU + fused (locs|scores) 1x1 head.
# ---------------------------------------------------------------------------
def rpn_head_pallas(x_nchw, w1, b1, wl, bl, ws, bs, *, vmem_budget=24 << 20):
    n, cin, H, W = x_nchw.shape
    assert n == 1, "RPN forward uses batch size 1 (it indexes [0])"
    cout = w1.shape[3]
    k_loc = wl.shape[1]
    k_sco = ws.shape[1]
    k_tot = k_loc + k_sco
    KPAD = ((k_tot + 127) // 128) * 128      # lane-dense fused head width
    CK = 3 * cin                             # dx-folded contraction depth

    # Pad W to a sublane multiple so the (TH, Wp, CK)->(TH*Wp, CK) collapse
    # never crosses (8,128) tiles (real RPN widths: 38, 50, ...).
    Wp = ((W + 7) // 8) * 8

    # --- Weights / biases (bf16 MXU operands, f32 bias add in the kernel). ---
    # Conv weight reshaped so K index = dx*Cin + c, matching the dx-folded
    # activation layout below.
    w1_cat = w1.reshape(3, CK, cout).astype(jnp.bfloat16)        # (3, 3*Cin, Cout)
    b1_2d = b1.reshape(1, cout).astype(jnp.float32)
    w_head = jnp.concatenate([wl, ws], axis=1)                   # (Cout, k_tot)
    w_head = jnp.pad(w_head, ((0, 0), (0, KPAD - k_tot))).astype(jnp.bfloat16)
    b_head = jnp.pad(jnp.concatenate([bl, bs]).reshape(1, k_tot),
                     ((0, 0), (0, KPAD - k_tot))).astype(jnp.float32)
    weight_bytes = (3 * CK * cout + cout * KPAD) * 2 + (cout + KPAD) * 4

    # --- Adaptive row tile: single grid step when the footprint fits VMEM. ---
    def _resident_bytes(th):
        n_t = -(-H // th)
        hp = n_t * th
        x_bytes = (hp + 2) * Wp * CK * 2                 # dx-folded bf16 plane
        out_blk = 2 * th * Wp * KPAD * 4                 # double-buffered out
        return x_bytes + weight_bytes + out_blk

    TH = H if _resident_bytes(H) <= vmem_budget else min(8, H)
    n_tiles = -(-H // TH)
    Hp = n_tiles * TH
    M = TH * Wp                                          # matmul M per tile
    assert M % 8 == 0

    # --- Activations: channel-last bf16, 1-pixel conv halo, padded to
    # (Hp, Wp).  The three dx column shifts are folded into the channel axis
    # ONCE here in XLA (layout plumbing, zero FLOPs), so the kernel's 3x3 conv
    # is 3 back-to-back K=3*Cin matmuls with no in-kernel shifted copies. ---
    x_hwc = jnp.transpose(x_nchw[0], (1, 2, 0)).astype(jnp.bfloat16)
    x_pad = jnp.pad(x_hwc, ((1, 1 + Hp - H), (1, 1 + Wp - W), (0, 0)))
    x_cat = jnp.concatenate([x_pad[:, d:d + Wp, :] for d in range(3)], axis=-1)
    # x_cat: (Hp + 2, Wp, 3*Cin)

    def kernel(x_ref, w1_ref, b1_ref, wh_ref, bh_ref, out_ref):
        i = pl.program_id(0)
        row0 = pl.multiple_of(i * TH, TH)

        # 3x3 conv as 3 M-batched K=3*Cin MXU matmuls.  Accumulator starts
        # from the first dot (no broadcast init); dots stay back-to-back with
        # no interleaved elementwise work so v7x can chain them through the
        # MRB's in-place accumulate (v5e/v6e just see fewer partial pops/adds).
        xs0 = x_ref[pl.ds(row0, TH), :, :].reshape(M, CK)
        acc = jnp.dot(xs0, w1_ref[0], preferred_element_type=jnp.float32)
        for dy in (1, 2):
            xs = x_ref[pl.ds(row0 + dy, TH), :, :].reshape(M, CK)
            acc = acc + jnp.dot(xs, w1_ref[dy],
                                preferred_element_type=jnp.float32)

        # Bias + ReLU + bf16 cast only after the last accumulating dot.
        feat = jnp.maximum(acc + b1_ref[...], 0.0).astype(jnp.bfloat16)

        # Fused locs+scores 1x1 heads: one lane-dense (M, KPAD) matmul + bias.
        out_ref[...] = (jnp.dot(feat, wh_ref[...],
                                preferred_element_type=jnp.float32)
                        + bh_ref[...])

    flops = 2 * Hp * Wp * (9 * cin) * cout + 2 * Hp * Wp * cout * KPAD
    in_bytes = int(x_cat.size) * 2 + weight_bytes
    out_bytes = Hp * Wp * KPAD * 4
    # VMEM limit derived from the actual resident + double-buffered output
    # sizes (with 2x headroom), instead of a fixed 32 MiB.
    vmem_limit = int(min(128 << 20,
                         max(8 << 20, 2 * (in_bytes + 2 * M * KPAD * 4))))

    vmem_specs = [pl.BlockSpec(memory_space=pltpu.MemorySpace.VMEM)
                  for _ in range(5)]
    out = pl.pallas_call(
        kernel,
        out_shape=jax.ShapeDtypeStruct((Hp * Wp, KPAD), jnp.float32),
        grid=(n_tiles,),
        in_specs=vmem_specs,
        out_specs=pl.BlockSpec((M, KPAD), lambda i: (i, 0)),
        compiler_params=pltpu.CompilerParams(
            # Megacore sharding only pays off with >=2 tiles; single-step
            # fast path skips it.
            dimension_semantics=(("arbitrary",) if n_tiles == 1
                                 else ("parallel",)),
            vmem_limit_bytes=vmem_limit),
        cost_estimate=pl.CostEstimate(flops=flops, transcendentals=0,
                                      bytes_accessed=in_bytes + out_bytes),
    )(x_cat, w1_cat, b1_2d, w_head, b_head)

    out = out.reshape(Hp, Wp, KPAD)[:H, :W]                      # drop padding
    locs_hwk = out[..., :k_loc]                                  # (H, W, A*4)
    scores_hwk = out[..., k_loc:k_tot]                           # (H, W, A*2)
    return locs_hwk, scores_hwk


# ---------------------------------------------------------------------------
# Pure-JAX f32 reference (for a correctness check in __main__).
# ---------------------------------------------------------------------------
def rpn_head_reference(x_nchw, w1, b1, wl, bl, ws, bs):
    feat = jax.lax.conv_general_dilated(
        x_nchw, w1, window_strides=(1, 1), padding=((1, 1), (1, 1)),
        dimension_numbers=("NCHW", "HWIO", "NCHW"))
    feat = jax.nn.relu(feat + b1[None, :, None, None])
    locs = jnp.einsum("nchw,ck->nhwk", feat, wl) + bl
    scores = jnp.einsum("nchw,ck->nhwk", feat, ws) + bs
    return locs[0], scores[0]


# ---------------------------------------------------------------------------
# Full RPN forward (matches the PyTorch module's semantics).
# ---------------------------------------------------------------------------
def rpn_forward(params, x, img_size, scale, anchor_base, stride):
    n, c, h, w = x.shape
    A = anchor_base.shape[0]
    anchors = get_anchor(anchor_base, stride, h, w)

    locs_hwk, scores_hwk = rpn_head_pallas(
        x, params["w1"], params["b1"], params["wl"], params["bl"],
        params["ws"], params["bs"])

    # permute(0,2,3,1).view(n, -1, 4/2) equivalents (kernel output is already
    # channel-last).
    rpn_locs = jnp.reshape(locs_hwk, (n, h * w * A, 4))
    rpn_scores = jnp.reshape(scores_hwk, (n, h * w * A, 2))

    # Host-side proposal generation (same as the original .cpu().numpy() path;
    # ranking uses the raw channel-1 logit, exactly like the reference).
    scores_np = np.asarray(rpn_scores)[:, :, 1]
    rpn_loc = np.asarray(rpn_locs)[0]
    scores_np = scores_np[0]

    rois = transform_locs(anchors, rpn_loc)
    H_img, W_img = img_size
    rois[:, 0] = np.clip(rois[:, 0], 0, W_img)
    rois[:, 1] = np.clip(rois[:, 1], 0, H_img)
    rois[:, 2] = np.clip(rois[:, 2], 0, W_img)
    rois[:, 3] = np.clip(rois[:, 3], 0, H_img)

    min_size = 16 * scale
    ws_ = rois[:, 2] - rois[:, 0]
    hs_ = rois[:, 3] - rois[:, 1]
    keep = np.where((ws_ >= min_size) & (hs_ >= min_size))[0]
    rois = rois[keep, :]
    scores_np = scores_np[keep]

    pre_nms, post_nms, nms_thresh = 12000, 2000, 0.7
    order = scores_np.argsort()[::-1]
    order = order[:pre_nms]
    roi_tmp = rois[order, :]
    keep = nms(roi_tmp, nms_thresh)
    keep = keep[:post_nms]
    roi = roi_tmp[keep]
    return rpn_locs, rpn_scores, roi, anchors


if __name__ == "__main__":
    key = jax.random.PRNGKey(0)
    # Small but lane-dense shapes: cin=cout=128 channels, 16x16 feature map,
    # stride=16, 9 anchors.  Footprint fits VMEM -> TH=H=16, grid=(1,), M=256.
    cin, cout, stride = 128, 128, 16
    H = W = 16
    anchor_base = generate_anchor(strides=stride)
    A = anchor_base.shape[0]                     # 9 anchors

    k_x, k_w1, k_wl, k_ws = jax.random.split(key, 4)
    x = jax.random.normal(k_x, (1, cin, H, W), jnp.float32)      # NCHW input

    # init_normal(mean=0, std=0.01) on weights, zero bias (deterministic).
    params = dict(
        w1=jax.random.normal(k_w1, (3, 3, cin, cout), jnp.float32) * 0.01,
        b1=jnp.zeros((cout,), jnp.float32),
        wl=jax.random.normal(k_wl, (cout, A * 4), jnp.float32) * 0.01,
        bl=jnp.zeros((A * 4,), jnp.float32),
        ws=jax.random.normal(k_ws, (cout, A * 2), jnp.float32) * 0.01,
        bs=jnp.zeros((A * 2,), jnp.float32),
    )

    img_size = (H * stride, W * stride)          # (h, w) of the input image
    rpn_locs, rpn_scores, roi, anchors = rpn_forward(
        params, x, img_size, scale=1.0, anchor_base=anchor_base, stride=stride)
    jax.block_until_ready((rpn_locs, rpn_scores))

    # Correctness check against a pure-JAX f32 reference (loose tolerance for
    # bf16 MXU operands).
    ref_locs, ref_scores = rpn_head_reference(
        x, params["w1"], params["b1"], params["wl"], params["bl"],
        params["ws"], params["bs"])
    ref_locs = np.asarray(ref_locs).reshape(1, H * W * A, 4)
    ref_scores = np.asarray(ref_scores).reshape(1, H * W * A, 2)
    np.testing.assert_allclose(np.asarray(rpn_locs), ref_locs,
                               atol=2e-2, rtol=2e-2)
    np.testing.assert_allclose(np.asarray(rpn_scores), ref_scores,
                               atol=2e-2, rtol=2e-2)

    assert rpn_locs.shape == (1, H * W * A, 4)
    assert rpn_scores.shape == (1, H * W * A, 2)
    assert anchors.shape == (H * W * A, 4)
    assert roi.ndim == 2 and roi.shape[1] == 4
    print("KERNEL_OK")
</pallas_src>

<mosaic_0001>
module attributes {stable_mosaic.version = 11 : i64} {
  func.func @kernel(%arg0: i32, %arg1: memref<18x16x384xbf16, #tpu.memory_space<vmem>>, %arg2: memref<3x384x128xbf16, #tpu.memory_space<vmem>>, %arg3: memref<1x128xf32, #tpu.memory_space<vmem>>, %arg4: memref<128x128xbf16, #tpu.memory_space<vmem>>, %arg5: memref<1x128xf32, #tpu.memory_space<vmem>>, %arg6: memref<256x128xf32, #tpu.memory_space<vmem>>) attributes {dimension_semantics = [#tpu.dimension_semantics<arbitrary>], iteration_bounds = array<i64: 1>, scalar_prefetch = 0 : i64, scratch_operands = 0 : i64, tpu.core_type = #tpu.core_type<tc>, window_params = [{pipeline_mode = #tpu.pipeline_mode<synchronous>, transform_indices = @transform_0, window_bounds = array<i64: 18, 16, 384>}, {pipeline_mode = #tpu.pipeline_mode<synchronous>, transform_indices = @transform_1, window_bounds = array<i64: 3, 384, 128>}, {pipeline_mode = #tpu.pipeline_mode<synchronous>, transform_indices = @transform_2, window_bounds = array<i64: 1, 128>}, {pipeline_mode = #tpu.pipeline_mode<synchronous>, transform_indices = @transform_3, window_bounds = array<i64: 128, 128>}, {pipeline_mode = #tpu.pipeline_mode<synchronous>, transform_indices = @transform_4, window_bounds = array<i64: 1, 128>}, {transform_indices = @transform_5, window_bounds = array<i64: 256, 128>}]} {
    %c16_i32 = arith.constant 16 : i32
    %0 = arith.muli %arg0, %c16_i32 : i32
    %1 = tpu.assume_multiple %0, 16 : i32
    %2 = arith.index_cast %1 : i32 to index
    %c0 = arith.constant 0 : index
    %c0_0 = arith.constant 0 : index
    %3 = vector.load %arg1[%2, %c0, %c0_0] : memref<18x16x384xbf16, #tpu.memory_space<vmem>>, vector<16x16x384xbf16>
    %4 = vector.shape_cast %3 : vector<16x16x384xbf16> to vector<256x384xbf16>
    %c0_1 = arith.constant 0 : index
    %c0_2 = arith.constant 0 : index
    %c0_3 = arith.constant 0 : index
    %5 = vector.load %arg2[%c0_1, %c0_2, %c0_3] : memref<3x384x128xbf16, #tpu.memory_space<vmem>>, vector<1x384x128xbf16>
    %6 = vector.shape_cast %5 : vector<1x384x128xbf16> to vector<384x128xbf16>
    %cst = arith.constant dense<0.000000e+00> : vector<256x128xf32>
    %7 = tpu.matmul %4, %6, %cst {dimension_numbers = #tpu.dot_dimension_numbers<[1], [0], [0], [1], [0, 0, 1, 1], [], []>} : vector<256x384xbf16>, vector<384x128xbf16>, vector<256x128xf32> -> vector<256x128xf32>
    %c1_i32 = arith.constant 1 : i32
    %8 = arith.addi %1, %c1_i32 : i32
    %9 = arith.index_cast %8 : i32 to index
    %c0_4 = arith.constant 0 : index
    %c0_5 = arith.constant 0 : index
    %10 = vector.load %arg1[%9, %c0_4, %c0_5] : memref<18x16x384xbf16, #tpu.memory_space<vmem>>, vector<16x16x384xbf16>
    %11 = vector.shape_cast %10 : vector<16x16x384xbf16> to vector<256x384xbf16>
    %c1 = arith.constant 1 : index
    %c0_6 = arith.constant 0 : index
    %c0_7 = arith.constant 0 : index
    %12 = vector.load %arg2[%c1, %c0_6, %c0_7] : memref<3x384x128xbf16, #tpu.memory_space<vmem>>, vector<1x384x128xbf16>
    %13 = vector.shape_cast %12 : vector<1x384x128xbf16> to vector<384x128xbf16>
    %cst_8 = arith.constant dense<0.000000e+00> : vector<256x128xf32>
    %14 = tpu.matmul %11, %13, %cst_8 {dimension_numbers = #tpu.dot_dimension_numbers<[1], [0], [0], [1], [0, 0, 1, 1], [], []>} : vector<256x384xbf16>, vector<384x128xbf16>, vector<256x128xf32> -> vector<256x128xf32>
    %15 = arith.addf %7, %14 : vector<256x128xf32>
    %c2_i32 = arith.constant 2 : i32
    %16 = arith.addi %1, %c2_i32 : i32
    %17 = arith.index_cast %16 : i32 to index
    %c0_9 = arith.constant 0 : index
    %c0_10 = arith.constant 0 : index
    %18 = vector.load %arg1[%17, %c0_9, %c0_10] : memref<18x16x384xbf16, #tpu.memory_space<vmem>>, vector<16x16x384xbf16>
    %19 = vector.shape_cast %18 : vector<16x16x384xbf16> to vector<256x384xbf16>
    %c2 = arith.constant 2 : index
    %c0_11 = arith.constant 0 : index
    %c0_12 = arith.constant 0 : index
    %20 = vector.load %arg2[%c2, %c0_11, %c0_12] : memref<3x384x128xbf16, #tpu.memory_space<vmem>>, vector<1x384x128xbf16>
    %21 = vector.shape_cast %20 : vector<1x384x128xbf16> to vector<384x128xbf16>
    %cst_13 = arith.constant dense<0.000000e+00> : vector<256x128xf32>
    %22 = tpu.matmul %19, %21, %cst_13 {dimension_numbers = #tpu.dot_dimension_numbers<[1], [0], [0], [1], [0, 0, 1, 1], [], []>} : vector<256x384xbf16>, vector<384x128xbf16>, vector<256x128xf32> -> vector<256x128xf32>
    %23 = arith.addf %15, %22 : vector<256x128xf32>
    %c0_14 = arith.constant 0 : index
    %c0_15 = arith.constant 0 : index
    %24 = vector.load %arg3[%c0_14, %c0_15] : memref<1x128xf32, #tpu.memory_space<vmem>>, vector<1x128xf32>
    %25 = vector.broadcast %24 : vector<1x128xf32> to vector<256x128xf32>
    %26 = arith.addf %23, %25 : vector<256x128xf32>
    %cst_16 = arith.constant 0.000000e+00 : f32
    %27 = vector.broadcast %cst_16 : f32 to vector<256x128xf32>
    %28 = arith.maximumf %26, %27 : vector<256x128xf32>
    %29 = arith.truncf %28 : vector<256x128xf32> to vector<256x128xbf16>
    %c0_17 = arith.constant 0 : index
    %c0_18 = arith.constant 0 : index
    %30 = vector.load %arg4[%c0_17, %c0_18] : memref<128x128xbf16, #tpu.memory_space<vmem>>, vector<128x128xbf16>
    %cst_19 = arith.constant dense<0.000000e+00> : vector<256x128xf32>
    %31 = tpu.matmul %29, %30, %cst_19 {dimension_numbers = #tpu.dot_dimension_numbers<[1], [0], [0], [1], [0, 0, 1, 1], [], []>} : vector<256x128xbf16>, vector<128x128xbf16>, vector<256x128xf32> -> vector<256x128xf32>
    %c0_20 = arith.constant 0 : index
    %c0_21 = arith.constant 0 : index
    %32 = vector.load %arg5[%c0_20, %c0_21] : memref<1x128xf32, #tpu.memory_space<vmem>>, vector<1x128xf32>
    %33 = vector.broadcast %32 : vector<1x128xf32> to vector<256x128xf32>
    %34 = arith.addf %31, %33 : vector<256x128xf32>
    %c0_22 = arith.constant 0 : index
    %c0_23 = arith.constant 0 : index
    %35 = vector.load %arg6[%c0_22, %c0_23] : memref<256x128xf32, #tpu.memory_space<vmem>>, vector<256x128xf32>
    tpu.vector_store %arg6[%c0_22, %c0_23], %34 {strides = array<i32>} : memref<256x128xf32, #tpu.memory_space<vmem>>, vector<256x128xf32>,
    return
  }
  func.func @transform_0(%arg0: i32) -> (i32, i32, i32) {
    %c0_i32 = arith.constant 0 : i32
    %c0_i32_0 = arith.constant 0 : i32
    %c0_i32_1 = arith.constant 0 : i32
    %c0_i32_2 = arith.constant 0 : i32
    return %c0_i32, %c0_i32_0, %c0_i32_1 : i32, i32, i32
  }
  func.func @transform_1(%arg0: i32) -> (i32, i32, i32) {
    %c0_i32 = arith.constant 0 : i32
    %c0_i32_0 = arith.constant 0 : i32
    %c0_i32_1 = arith.constant 0 : i32
    %c0_i32_2 = arith.constant 0 : i32
    return %c0_i32, %c0_i32_0, %c0_i32_1 : i32, i32, i32
  }
  func.func @transform_2(%arg0: i32) -> (i32, i32) {
    %c0_i32 = arith.constant 0 : i32
    %c0_i32_0 = arith.constant 0 : i32
    %c0_i32_1 = arith.constant 0 : i32
    return %c0_i32, %c0_i32_0 : i32, i32
  }
  func.func @transform_3(%arg0: i32) -> (i32, i32) {
    %c0_i32 = arith.constant 0 : i32
    %c0_i32_0 = arith.constant 0 : i32
    %c0_i32_1 = arith.constant 0 : i32
    return %c0_i32, %c0_i32_0 : i32, i32
  }
  func.func @transform_4(%arg0: i32) -> (i32, i32) {
    %c0_i32 = arith.constant 0 : i32
    %c0_i32_0 = arith.constant 0 : i32
    %c0_i32_1 = arith.constant 0 : i32
    return %c0_i32, %c0_i32_0 : i32, i32
  }
  func.func @transform_5(%arg0: i32) -> (i32, i32) {
    %c0_i32 = arith.constant 0 : i32
    %c0_i32_0 = arith.constant 0 : i32
    return %arg0, %c0_i32 : i32, i32
  }
}

</mosaic_0001>

<llo_original>
// kernel: tpu_custom_call.1
$region0: #{tpu_custom_call.1}
  #allocation0 [shape = 'u32[]', space=smem, size = 0x4, offset = 0x4, fixed_abs, tag = 'smem constant byte address 0x4 - core index']
  #allocation1 [shape = 'u32[72,128]{1,0:T(1,128)}', space=vmem, size = 0x9000, scoped, tag = 'internal scratch']
  %s0 = inlined_call_operand.hbm [shape: bf16[18,16,384], index: 0, kind: input, shape index: {}]
  %s1 = inlined_call_operand.hbm [shape: bf16[3,384,128], index: 1, kind: input, shape index: {}]
  %s2 = inlined_call_operand.vmem [shape: f32[1,128], index: 2, kind: input, shape index: {}]
  %s3 = inlined_call_operand.hbm [shape: bf16[128,128], index: 3, kind: input, shape index: {}]
  %s4 = inlined_call_operand.vmem [shape: f32[1,128], index: 4, kind: input, shape index: {}]
  %s5 = inlined_call_operand.hbm [shape: f32[256,128], index: 5, kind: output, shape index: {}]
  %s6 = sld [smem:[#allocation0]]
  $region42: #{tpu_custom_call.1} parent=0
    _
  %s8 = ssub.s32 1, %s6
  %s9 = scalar_select 0, %s8, %s6
  $region1: #{tpu_custom_call.1} parent=0
    #allocation2 [shape = 'u8[221184]{0}', space=vmem, size = 0x36000, scoped, tag = 'input window, operand 0, single buffered']
    #allocation3 [shape = 's32[1]{0}', space=sflag, size = 0x4, scoped, tag = 'scoped memory for tpu_custom_call.1']
    #allocation4 [shape = 's32[1]{0}', space=sflag, size = 0x4, scoped, tag = 'scoped memory for tpu_custom_call.1']
    #allocation5 [shape = 'u8[294912]{0}', space=vmem, size = 0x48000, scoped, tag = 'input window, operand 1, single buffered']
    #allocation6 [shape = 's32[1]{0}', space=sflag, size = 0x4, scoped, tag = 'scoped memory for tpu_custom_call.1']
    #allocation7 [shape = 'u8[32768]{0}', space=vmem, size = 0x8000, scoped, tag = 'input window, operand 3, single buffered']
    #allocation8 [shape = 'u8[131072]{0}', space=vmem, size = 0x20000, scoped, tag = 'output window, operand 0, single buffered']
    %10 = vsyncpa [#allocation3], 0
    %11 = vsyncpa [#allocation6], 0
    %12 = vsyncpa [#allocation4], 0
    // Predicated region
    $region2: #{tpu_custom_call.1} parent=1 // pred_check
      _
    $region3: #{tpu_custom_call.1} parent=1 // pred_check_branch
      %14 = sbr.rel (0) target = $region5
    $region4: #{tpu_custom_call.1} parent=1 // pred_region
      %16 = vsyncadd [#allocation3], 0
      %s17 = sshll.u32 %s0, 4
      %s18 = int_to_ptr.hbm [resolvable:$true] %s17
      %s19 = sshll.u32 [#allocation2], 4
      %s20 = int_to_ptr.vmem [resolvable:$true] %s19
      %25 = dma.hbm_to_vmem [thread:$0]  %s18, 6912, %s20, [#allocation3], 192, 192, 12
    $region5: #{tpu_custom_call.1} parent=1 // pred_fallthru
      _
    // Predicated region
    $region6: #{tpu_custom_call.1} parent=1 // pred_check
      _
    $region7: #{tpu_custom_call.1} parent=1 // pred_check_branch
      %27 = sbr.rel (0) target = $region9
    $region8: #{tpu_custom_call.1} parent=1 // pred_region
      %29 = vsyncadd [#allocation6], 0
      %s30 = sshll.u32 %s1, 4
      %s31 = int_to_ptr.hbm [resolvable:$true] %s30
      %s32 = sshll.u32 [#allocation5], 4
      %s33 = int_to_ptr.vmem [resolvable:$true] %s32
      %38 = dma.hbm_to_vmem [thread:$0]  %s31, 9216, %s33, [#allocation6], 64, 64, 4
    $region9: #{tpu_custom_call.1} parent=1 // pred_fallthru
      _
    // Predicated region
    $region10: #{tpu_custom_call.1} parent=1 // pred_check
      _
    $region11: #{tpu_custom_call.1} parent=1 // pred_check_branch
      %40 = sbr.rel (0) target = $region13
    $region12: #{tpu_custom_call.1} parent=1 // pred_region
      _
    $region13: #{tpu_custom_call.1} parent=1 // pred_fallthru
      _
    // Predicated region
    $region14: #{tpu_custom_call.1} parent=1 // pred_check
      _
    $region15: #{tpu_custom_call.1} parent=1 // pred_check_branch
      %42 = sbr.rel (0) target = $region17
    $region16: #{tpu_custom_call.1} parent=1 // pred_region
      %44 = vsyncadd [#allocation6], 0
      %s45 = sshll.u32 %s3, 4
      %s46 = int_to_ptr.hbm [resolvable:$true] %s45
      %s47 = sshll.u32 [#allocation7], 4
      %s48 = int_to_ptr.vmem [resolvable:$true] %s47
      %53 = dma.hbm_to_vmem [thread:$0]  %s46, 1024, %s48, [#allocation6], 64, 64, 4
    $region17: #{tpu_custom_call.1} parent=1 // pred_fallthru
      _
    // Predicated region
    $region18: #{tpu_custom_call.1} parent=1 // pred_check
      _
    $region19: #{tpu_custom_call.1} parent=1 // pred_check_branch
      %55 = sbr.rel (0) target = $region21
    $region20: #{tpu_custom_call.1} parent=1 // pred_region
      _
    $region21: #{tpu_custom_call.1} parent=1 // pred_fallthru
      _
    // Predicated region
    $region22: #{tpu_custom_call.1} parent=1 // pred_check
      _
    $region23: #{tpu_custom_call.1} parent=1 // pred_check_branch
      %57 = sbr.rel (0) target = $region25
    $region24: #{tpu_custom_call.1} parent=1 // pred_region
      %59 = dma.done [#allocation3], 6912
    $region25: #{tpu_custom_call.1} parent=1 // pred_fallthru
      _
    // Predicated region
    $region26: #{tpu_custom_call.1} parent=1 // pred_check
      _
    $region27: #{tpu_custom_call.1} parent=1 // pred_check_branch
      %61 = sbr.rel (0) target = $region29
    $region28: #{tpu_custom_call.1} parent=1 // pred_region
      %63 = dma.done [#allocation6], 9216
    $region29: #{tpu_custom_call.1} parent=1 // pred_fallthru
      _
    // Predicated region
    $region30: #{tpu_custom_call.1} parent=1 // pred_check
      _
    $region31: #{tpu_custom_call.1} parent=1 // pred_check_branch
      %65 = sbr.rel (0) target = $region33
    $region32: #{tpu_custom_call.1} parent=1 // pred_region
      %67 = dma.done [#allocation6], 1024
    $region33: #{tpu_custom_call.1} parent=1 // pred_fallthru
      _
    %s68 = smul.u32 0, 16
    %s69 = smul.u32 %s68, 6
    %s70 = smul.addr %s69, 4
    %s71 = scalar_lea.vmem [#allocation2], %s70
    %v72 = vld [vmem:[%s71] sm:$0xff]
    %v73 = vld [vmem:[%s71 + $0x8] sm:$0xf]
    %v74 = vld [vmem:[%s71 + $0xc] sm:$0xff]
    %v75 = vld [vmem:[%s71 + $0x14] sm:$0xf]
    %v76 = vld [vmem:[%s71 + $0x18] sm:$0xff]
    %v77 = vld [vmem:[%s71 + $0x20] sm:$0xf]
    %v78 = vld [vmem:[%s71 + $0x24] sm:$0xff]
    %v79 = vld [vmem:[%s71 + $0x2c] sm:$0xf]
    %v80 = vld [vmem:[%s71 + $0x30] sm:$0xff]
    %v81 = vld [vmem:[%s71 + $0x38] sm:$0xf]
    %v82 = vld [vmem:[%s71 + $0x3c] sm:$0xff]
    %v83 = vld [vmem:[%s71 + $0x44] sm:$0xf]
    %v84 = vld [vmem:[%s71 + $0x48] sm:$0xff]
    %v85 = vld [vmem:[%s71 + $0x50] sm:$0xf]
    %v86 = vld [vmem:[%s71 + $0x54] sm:$0xff]
    %v87 = vld [vmem:[%s71 + $0x5c] sm:$0xf]
    %v88 = vld [vmem:[%s71 + $0x60] sm:$0xff]
    %v89 = vld [vmem:[%s71 + $0x68] sm:$0xf]
    %v90 = vld [vmem:[%s71 + $0x6c] sm:$0xff]
    %v91 = vld [vmem:[%s71 + $0x74] sm:$0xf]
    %v92 = vld [vmem:[%s71 + $0x78] sm:$0xff]
    %v93 = vld [vmem:[%s71 + $0x80] sm:$0xf]
    %v94 = vld [vmem:[%s71 + $0x84] sm:$0xff]
    %v95 = vld [vmem:[%s71 + $0x8c] sm:$0xf]
    %v96 = vld [vmem:[%s71 + $0x90] sm:$0xff]
    %v97 = vld [vmem:[%s71 + $0x98] sm:$0xf]
    %v98 = vld [vmem:[%s71 + $0x9c] sm:$0xff]
    %v99 = vld [vmem:[%s71 + $0xa4] sm:$0xf]
    %v100 = vld [vmem:[%s71 + $0xa8] sm:$0xff]
    %v101 = vld [vmem:[%s71 + $0xb0] sm:$0xf]
    %v102 = vld [vmem:[%s71 + $0xb4] sm:$0xff]
    %v103 = vld [vmem:[%s71 + $0xbc] sm:$0xf]
    %v104 = vld [vmem:[%s71 + $0xc0] sm:$0xff]
    %v105 = vld [vmem:[%s71 + $0xc8] sm:$0xf]
    %v106 = vld [vmem:[%s71 + $0xcc] sm:$0xff]
    %v107 = vld [vmem:[%s71 + $0xd4] sm:$0xf]
    %v108 = vld [vmem:[%s71 + $0xd8] sm:$0xff]
    %v109 = vld [vmem:[%s71 + $0xe0] sm:$0xf]
    %v110 = vld [vmem:[%s71 + $0xe4] sm:$0xff]
    %v111 = vld [vmem:[%s71 + $0xec] sm:$0xf]
    %v112 = vld [vmem:[%s71 + $0xf0] sm:$0xff]
    %v113 = vld [vmem:[%s71 + $0xf8] sm:$0xf]
    %v114 = vld [vmem:[%s71 + $0xfc] sm:$0xff]
    %v115 = vld [vmem:[%s71 + $0x104] sm:$0xf]
    %v116 = vld [vmem:[%s71 + $0x108] sm:$0xff]
    %v117 = vld [vmem:[%s71 + $0x110] sm:$0xf]
    %v118 = vld [vmem:[%s71 + $0x114] sm:$0xff]
    %v119 = vld [vmem:[%s71 + $0x11c] sm:$0xf]
    %v120 = vld [vmem:[%s71 + $0x120] sm:$0xff]
    %v121 = vld [vmem:[%s71 + $0x128] sm:$0xf]
    %v122 = vld [vmem:[%s71 + $0x12c] sm:$0xff]
    %v123 = vld [vmem:[%s71 + $0x134] sm:$0xf]
    %v124 = vld [vmem:[%s71 + $0x138] sm:$0xff]
    %v125 = vld [vmem:[%s71 + $0x140] sm:$0xf]
    %v126 = vld [vmem:[%s71 + $0x144] sm:$0xff]
    %v127 = vld [vmem:[%s71 + $0x14c] sm:$0xf]
    %v128 = vld [vmem:[%s71 + $0x150] sm:$0xff]
    %v129 = vld [vmem:[%s71 + $0x158] sm:$0xf]
    %v130 = vld [vmem:[%s71 + $0x15c] sm:$0xff]
    %v131 = vld [vmem:[%s71 + $0x164] sm:$0xf]
    %v132 = vld [vmem:[%s71 + $0x168] sm:$0xff]
    %v133 = vld [vmem:[%s71 + $0x170] sm:$0xf]
    %v134 = vld [vmem:[%s71 + $0x174] sm:$0xff]
    %v135 = vld [vmem:[%s71 + $0x17c] sm:$0xf]
    %v136 = vld [vmem:[#allocation5] sm:$0xf]
    %v137 = vld [vmem:[#allocation5 + $0x4] sm:$0xf]
    %v138 = vld [vmem:[#allocation5 + $0x8] sm:$0xf]
    %v139 = vld [vmem:[#allocation5 + $0xc] sm:$0xf]
    %v140 = vld [vmem:[#allocation5 + $0x10] sm:$0xf]
    %v141 = vld [vmem:[#allocation5 + $0x14] sm:$0xf]
    %v142 = vld [vmem:[#allocation5 + $0x18] sm:$0xf]
    %v143 = vld [vmem:[#allocation5 + $0x1c] sm:$0xf]
    %v144 = vld [vmem:[#allocation5 + $0x20] sm:$0xf]
    %v145 = vld [vmem:[#allocation5 + $0x24] sm:$0xf]
    %v146 = vld [vmem:[#allocation5 + $0x28] sm:$0xf]
    %v147 = vld [vmem:[#allocation5 + $0x2c] sm:$0xf]
    %v148 = vld [vmem:[#allocation5 + $0x30] sm:$0xf]
    %v149 = vld [vmem:[#allocation5 + $0x34] sm:$0xf]
    %v150 = vld [vmem:[#allocation5 + $0x38] sm:$0xf]
    %v151 = vld [vmem:[#allocation5 + $0x3c] sm:$0xf]
    %v152 = vld [vmem:[#allocation5 + $0x40] sm:$0xf]
    %v153 = vld [vmem:[#allocation5 + $0x44] sm:$0xf]
    %v154 = vld [vmem:[#allocation5 + $0x48] sm:$0xf]
    %v155 = vld [vmem:[#allocation5 + $0x4c] sm:$0xf]
    %v156 = vld [vmem:[#allocation5 + $0x50] sm:$0xf]
    %v157 = vld [vmem:[#allocation5 + $0x54] sm:$0xf]
    %v158 = vld [vmem:[#allocation5 + $0x58] sm:$0xf]
    %v159 = vld [vmem:[#allocation5 + $0x5c] sm:$0xf]
    %v160 = vld [vmem:[#allocation5 + $0x60] sm:$0xf]
    %v161 = vld [vmem:[#allocation5 + $0x64] sm:$0xf]
    %v162 = vld [vmem:[#allocation5 + $0x68] sm:$0xf]
    %v163 = vld [vmem:[#allocation5 + $0x6c] sm:$0xf]
    %v164 = vld [vmem:[#allocation5 + $0x70] sm:$0xf]
    %v165 = vld [vmem:[#allocation5 + $0x74] sm:$0xf]
    %v166 = vld [vmem:[#allocation5 + $0x78] sm:$0xf]
    %v167 = vld [vmem:[#allocation5 + $0x7c] sm:$0xf]
    %v168 = vld [vmem:[#allocation5 + $0x80] sm:$0xf]
    %v169 = vld [vmem:[#allocation5 + $0x84] sm:$0xf]
    %v170 = vld [vmem:[#allocation5 + $0x88] sm:$0xf]
    %v171 = vld [vmem:[#allocation5 + $0x8c] sm:$0xf]
    %v172 = vld [vmem:[#allocation5 + $0x90] sm:$0xf]
    %v173 = vld [vmem:[#allocation5 + $0x94] sm:$0xf]
    %v174 = vld [vmem:[#allocation5 + $0x98] sm:$0xf]
    %v175 = vld [vmem:[#allocation5 + $0x9c] sm:$0xf]
    %v176 = vld [vmem:[#allocation5 + $0xa0] sm:$0xf]
    %v177 = vld [vmem:[#allocation5 + $0xa4] sm:$0xf]
    %v178 = vld [vmem:[#allocation5 + $0xa8] sm:$0xf]
    %v179 = vld [vmem:[#allocation5 + $0xac] sm:$0xf]
    %v180 = vld [vmem:[#allocation5 + $0xb0] sm:$0xf]
    %v181 = vld [vmem:[#allocation5 + $0xb4] sm:$0xf]
    %v182 = vld [vmem:[#allocation5 + $0xb8] sm:$0xf]
    %v183 = vld [vmem:[#allocation5 + $0xbc] sm:$0xf]
    %s184 = sadd.s32 %s68, 1
    %s185 = smul.u32 %s184, 6
    %s186 = smul.addr %s185, 4
    %s187 = scalar_lea.vmem [#allocation2], %s186
    %v188 = vld [vmem:[%s187] sm:$0xff]
    %v189 = vld [vmem:[%s187 + $0x8] sm:$0xf]
    %v190 = vld [vmem:[%s187 + $0xc] sm:$0xff]
    %v191 = vld [vmem:[%s187 + $0x14] sm:$0xf]
    %v192 = vld [vmem:[%s187 + $0x18] sm:$0xff]
    %v193 = vld [vmem:[%s187 + $0x20] sm:$0xf]
    %v194 = vld [vmem:[%s187 + $0x24] sm:$0xff]
    %v195 = vld [vmem:[%s187 + $0x2c] sm:$0xf]
    %v196 = vld [vmem:[%s187 + $0x30] sm:$0xff]
    %v197 = vld [vmem:[%s187 + $0x38] sm:$0xf]
    %v198 = vld [vmem:[%s187 + $0x3c] sm:$0xff]
    %v199 = vld [vmem:[%s187 + $0x44] sm:$0xf]
    %v200 = vld [vmem:[%s187 + $0x48] sm:$0xff]
    %v201 = vld [vmem:[%s187 + $0x50] sm:$0xf]
    %v202 = vld [vmem:[%s187 + $0x54] sm:$0xff]
    %v203 = vld [vmem:[%s187 + $0x5c] sm:$0xf]
    %v204 = vld [vmem:[%s187 + $0x60] sm:$0xff]
    %v205 = vld [vmem:[%s187 + $0x68] sm:$0xf]
    %v206 = vld [vmem:[%s187 + $0x6c] sm:$0xff]
    %v207 = vld [vmem:[%s187 + $0x74] sm:$0xf]
    %v208 = vld [vmem:[%s187 + $0x78] sm:$0xff]
    %v209 = vld [vmem:[%s187 + $0x80] sm:$0xf]
    %v210 = vld [vmem:[%s187 + $0x84] sm:$0xff]
    %v211 = vld [vmem:[%s187 + $0x8c] sm:$0xf]
    %v212 = vld [vmem:[%s187 + $0x90] sm:$0xff]
    %v213 = vld [vmem:[%s187 + $0x98] sm:$0xf]
    %v214 = vld [vmem:[%s187 + $0x9c] sm:$0xff]
    %v215 = vld [vmem:[%s187 + $0xa4] sm:$0xf]
    %v216 = vld [vmem:[%s187 + $0xa8] sm:$0xff]
    %v217 = vld [vmem:[%s187 + $0xb0] sm:$0xf]
    %v218 = vld [vmem:[%s187 + $0xb4] sm:$0xff]
    %v219 = vld [vmem:[%s187 + $0xbc] sm:$0xf]
    %v220 = vld [vmem:[%s187 + $0xc0] sm:$0xff]
    %v221 = vld [vmem:[%s187 + $0xc8] sm:$0xf]
    %v222 = vld [vmem:[%s187 + $0xcc] sm:$0xff]
    %v223 = vld [vmem:[%s187 + $0xd4] sm:$0xf]
    %v224 = vld [vmem:[%s187 + $0xd8] sm:$0xff]
    %v225 = vld [vmem:[%s187 + $0xe0] sm:$0xf]
    %v226 = vld [vmem:[%s187 + $0xe4] sm:$0xff]
    %v227 = vld [vmem:[%s187 + $0xec] sm:$0xf]
    %v228 = vld [vmem:[%s187 + $0xf0] sm:$0xff]
    %v229 = vld [vmem:[%s187 + $0xf8] sm:$0xf]
    %v230 = vld [vmem:[%s187 + $0xfc] sm:$0xff]
    %v231 = vld [vmem:[%s187 + $0x104] sm:$0xf]
    %v232 = vld [vmem:[%s187 + $0x108] sm:$0xff]
    %v233 = vld [vmem:[%s187 + $0x110] sm:$0xf]
    %v234 = vld [vmem:[%s187 + $0x114] sm:$0xff]
    %v235 = vld [vmem:[%s187 + $0x11c] sm:$0xf]
    %v236 = vld [vmem:[%s187 + $0x120] sm:$0xff]
    %v237 = vld [vmem:[%s187 + $0x128] sm:$0xf]
    %v238 = vld [vmem:[%s187 + $0x12c] sm:$0xff]
    %v239 = vld [vmem:[%s187 + $0x134] sm:$0xf]
    %v240 = vld [vmem:[%s187 + $0x138] sm:$0xff]
    %v241 = vld [vmem:[%s187 + $0x140] sm:$0xf]
    %v242 = vld [vmem:[%s187 + $0x144] sm:$0xff]
    %v243 = vld [vmem:[%s187 + $0x14c] sm:$0xf]
    %v244 = vld [vmem:[%s187 + $0x150] sm:$0xff]
    %v245 = vld [vmem:[%s187 + $0x158] sm:$0xf]
    %v246 = vld [vmem:[%s187 + $0x15c] sm:$0xff]
    %v247 = vld [vmem:[%s187 + $0x164] sm:$0xf]
    %v248 = vld [vmem:[%s187 + $0x168] sm:$0xff]
    %v249 = vld [vmem:[%s187 + $0x170] sm:$0xf]
    %v250 = vld [vmem:[%s187 + $0x174] sm:$0xff]
    %v251 = vld [vmem:[%s187 + $0x17c] sm:$0xf]
    %s252 = scalar_lea.vmem [#allocation5], 192
    %v253 = vld [vmem:[%s252] sm:$0xf]
    %v254 = vld [vmem:[%s252 + $0x4] sm:$0xf]
    %v255 = vld [vmem:[%s252 + $0x8] sm:$0xf]
    %v256 = vld [vmem:[%s252 + $0xc] sm:$0xf]
    %v257 = vld [vmem:[%s252 + $0x10] sm:$0xf]
    %v258 = vld [vmem:[%s252 + $0x14] sm:$0xf]
    %v259 = vld [vmem:[%s252 + $0x18] sm:$0xf]
    %v260 = vld [vmem:[%s252 + $0x1c] sm:$0xf]
    %v261 = vld [vmem:[%s252 + $0x20] sm:$0xf]
    %v262 = vld [vmem:[%s252 + $0x24] sm:$0xf]
    %v263 = vld [vmem:[%s252 + $0x28] sm:$0xf]
    %v264 = vld [vmem:[%s252 + $0x2c] sm:$0xf]
    %v265 = vld [vmem:[%s252 + $0x30] sm:$0xf]
    %v266 = vld [vmem:[%s252 + $0x34] sm:$0xf]
    %v267 = vld [vmem:[%s252 + $0x38] sm:$0xf]
    %v268 = vld [vmem:[%s252 + $0x3c] sm:$0xf]
    %v269 = vld [vmem:[%s252 + $0x40] sm:$0xf]
    %v270 = vld [vmem:[%s252 + $0x44] sm:$0xf]
    %v271 = vld [vmem:[%s252 + $0x48] sm:$0xf]
    %v272 = vld [vmem:[%s252 + $0x4c] sm:$0xf]
    %v273 = vld [vmem:[%s252 + $0x50] sm:$0xf]
    %v274 = vld [vmem:[%s252 + $0x54] sm:$0xf]
    %v275 = vld [vmem:[%s252 + $0x58] sm:$0xf]
    %v276 = vld [vmem:[%s252 + $0x5c] sm:$0xf]
    %v277 = vld [vmem:[%s252 + $0x60] sm:$0xf]
    %v278 = vld [vmem:[%s252 + $0x64] sm:$0xf]
    %v279 = vld [vmem:[%s252 + $0x68] sm:$0xf]
    %v280 = vld [vmem:[%s252 + $0x6c] sm:$0xf]
    %v281 = vld [vmem:[%s252 + $0x70] sm:$0xf]
    %v282 = vld [vmem:[%s252 + $0x74] sm:$0xf]
    %v283 = vld [vmem:[%s252 + $0x78] sm:$0xf]
    %v284 = vld [vmem:[%s252 + $0x7c] sm:$0xf]
    %v285 = vld [vmem:[%s252 + $0x80] sm:$0xf]
    %v286 = vld [vmem:[%s252 + $0x84] sm:$0xf]
    %v287 = vld [vmem:[%s252 + $0x88] sm:$0xf]
    %v288 = vld [vmem:[%s252 + $0x8c] sm:$0xf]
    %v289 = vld [vmem:[%s252 + $0x90] sm:$0xf]
    %v290 = vld [vmem:[%s252 + $0x94] sm:$0xf]
    %v291 = vld [vmem:[%s252 + $0x98] sm:$0xf]
    %v292 = vld [vmem:[%s252 + $0x9c] sm:$0xf]
    %v293 = vld [vmem:[%s252 + $0xa0] sm:$0xf]
    %v294 = vld [vmem:[%s252 + $0xa4] sm:$0xf]
    %v295 = vld [vmem:[%s252 + $0xa8] sm:$0xf]
    %v296 = vld [vmem:[%s252 + $0xac] sm:$0xf]
    %v297 = vld [vmem:[%s252 + $0xb0] sm:$0xf]
    %v298 = vld [vmem:[%s252 + $0xb4] sm:$0xf]
    %v299 = vld [vmem:[%s252 + $0xb8] sm:$0xf]
    %v300 = vld [vmem:[%s252 + $0xbc] sm:$0xf]
    %v365 = vunpack.c.l.b16 %v188
    %v366 = vunpack.c.h.b16 %v188
    %v367 = vunpack.c.l.b16 %v189
    %v368 = vunpack.c.l.b16 %v190
    %v369 = vunpack.c.h.b16 %v190
    %v370 = vunpack.c.l.b16 %v191
    %v371 = vunpack.c.l.b16 %v192
    %v372 = vunpack.c.h.b16 %v192
    %v373 = vunpack.c.l.b16 %v193
    %v374 = vunpack.c.l.b16 %v194
    %v375 = vunpack.c.h.b16 %v194
    %v376 = vunpack.c.l.b16 %v195
    %v377 = vunpack.c.l.b16 %v196
    %v378 = vunpack.c.h.b16 %v196
    %v379 = vunpack.c.l.b16 %v197
    %v380 = vunpack.c.l.b16 %v198
    %v381 = vunpack.c.h.b16 %v198
    %v382 = vunpack.c.l.b16 %v199
    %v383 = vunpack.c.l.b16 %v200
    %v384 = vunpack.c.h.b16 %v200
    %v385 = vunpack.c.l.b16 %v201
    %v386 = vunpack.c.l.b16 %v202
    %v387 = vunpack.c.h.b16 %v202
    %v388 = vunpack.c.l.b16 %v203
    %v389 = vunpack.c.l.b16 %v204
    %v390 = vunpack.c.h.b16 %v204
    %v391 = vunpack.c.l.b16 %v205
    %v392 = vunpack.c.l.b16 %v206
    %v393 = vunpack.c.h.b16 %v206
    %v394 = vunpack.c.l.b16 %v207
    %v395 = vunpack.c.l.b16 %v208
    %v396 = vunpack.c.h.b16 %v208
    %v397 = vunpack.c.l.b16 %v209
    %v398 = vunpack.c.l.b16 %v210
    %v399 = vunpack.c.h.b16 %v210
    %v400 = vunpack.c.l.b16 %v211
    %v401 = vunpack.c.l.b16 %v212
    %v402 = vunpack.c.h.b16 %v212
    %v403 = vunpack.c.l.b16 %v213
    %v404 = vunpack.c.l.b16 %v214
    %v405 = vunpack.c.h.b16 %v214
    %v406 = vunpack.c.l.b16 %v215
    %v407 = vunpack.c.l.b16 %v216
    %v408 = vunpack.c.h.b16 %v216
    %v409 = vunpack.c.l.b16 %v217
    %v410 = vunpack.c.l.b16 %v218
    %v411 = vunpack.c.h.b16 %v218
    %v412 = vunpack.c.l.b16 %v219
    %v413 = vunpack.c.l.b16 %v220
    %v414 = vunpack.c.h.b16 %v220
    %v415 = vunpack.c.l.b16 %v221
    %v416 = vunpack.c.l.b16 %v222
    %v417 = vunpack.c.h.b16 %v222
    %v418 = vunpack.c.l.b16 %v223
    %v419 = vunpack.c.l.b16 %v224
    %v420 = vunpack.c.h.b16 %v224
    %v421 = vunpack.c.l.b16 %v225
    %v422 = vunpack.c.l.b16 %v226
    %v423 = vunpack.c.h.b16 %v226
    %v424 = vunpack.c.l.b16 %v227
    %v425 = vunpack.c.l.b16 %v228
    %v426 = vunpack.c.h.b16 %v228
    %v427 = vunpack.c.l.b16 %v229
    %v428 = vunpack.c.l.b16 %v230
    %v429 = vunpack.c.h.b16 %v230
    %v430 = vunpack.c.l.b16 %v231
    %v431 = vunpack.c.l.b16 %v232
    %v432 = vunpack.c.h.b16 %v232
    %v433 = vunpack.c.l.b16 %v233
    %v434 = vunpack.c.l.b16 %v234
    %v435 = vunpack.c.h.b16 %v234
    %v436 = vunpack.c.l.b16 %v235
    %v437 = vunpack.c.l.b16 %v236
    %v438 = vunpack.c.h.b16 %v236
    %v439 = vunpack.c.l.b16 %v237
    %v440 = vunpack.c.l.b16 %v238
    %v441 = vunpack.c.h.b16 %v238
    %v442 = vunpack.c.l.b16 %v239
    %v443 = vunpack.c.l.b16 %v240
    %v444 = vunpack.c.h.b16 %v240
    %v445 = vunpack.c.l.b16 %v241
    %v446 = vunpack.c.l.b16 %v242
    %v447 = vunpack.c.h.b16 %v242
    %v448 = vunpack.c.l.b16 %v243
    %v449 = vunpack.c.l.b16 %v244
    %v450 = vunpack.c.h.b16 %v244
    %v451 = vunpack.c.l.b16 %v245
    %v452 = vunpack.c.l.b16 %v246
    %v453 = vunpack.c.h.b16 %v246
    %v454 = vunpack.c.l.b16 %v247
    %v455 = vunpack.c.l.b16 %v248
    %v456 = vunpack.c.h.b16 %v248
    %v457 = vunpack.c.l.b16 %v249
    %v458 = vunpack.c.l.b16 %v250
    %v459 = vunpack.c.h.b16 %v250
    %v460 = vunpack.c.l.b16 %v251
    %v461 = vpack.c.b16 %v368, %v365
    %v462 = vpack.c.b16 %v369, %v366
    %v463 = vpack.c.b16 %v370, %v367
    %v464 = vpack.c.b16 %v374, %v371
    %v465 = vpack.c.b16 %v375, %v372
    %v466 = vpack.c.b16 %v376, %v373
    %v467 = vpack.c.b16 %v380, %v377
    %v468 = vpack.c.b16 %v381, %v378
    %v469 = vpack.c.b16 %v382, %v379
    %v470 = vpack.c.b16 %v386, %v383
    %v471 = vpack.c.b16 %v387, %v384
    %v472 = vpack.c.b16 %v388, %v385
    %v473 = vpack.c.b16 %v392, %v389
    %v474 = vpack.c.b16 %v393, %v390
    %v475 = vpack.c.b16 %v394, %v391
    %v476 = vpack.c.b16 %v398, %v395
    %v477 = vpack.c.b16 %v399, %v396
    %v478 = vpack.c.b16 %v400, %v397
    %v479 = vpack.c.b16 %v404, %v401
    %v480 = vpack.c.b16 %v405, %v402
    %v481 = vpack.c.b16 %v406, %v403
    %v482 = vpack.c.b16 %v410, %v407
    %v483 = vpack.c.b16 %v411, %v408
    %v484 = vpack.c.b16 %v412, %v409
    %v485 = vpack.c.b16 %v416, %v413
    %v486 = vpack.c.b16 %v417, %v414
    %v487 = vpack.c.b16 %v418, %v415
    %v488 = vpack.c.b16 %v422, %v419
    %v489 = vpack.c.b16 %v423, %v420
    %v490 = vpack.c.b16 %v424, %v421
    %v491 = vpack.c.b16 %v428, %v425
    %v492 = vpack.c.b16 %v429, %v426
    %v493 = vpack.c.b16 %v430, %v427
    %v494 = vpack.c.b16 %v434, %v431
    %v495 = vpack.c.b16 %v435, %v432
    %v496 = vpack.c.b16 %v436, %v433
    %v497 = vpack.c.b16 %v440, %v437
    %v498 = vpack.c.b16 %v441, %v438
    %v499 = vpack.c.b16 %v442, %v439
    %v500 = vpack.c.b16 %v446, %v443
    %v501 = vpack.c.b16 %v447, %v444
    %v502 = vpack.c.b16 %v448, %v445
    %v503 = vpack.c.b16 %v452, %v449
    %v504 = vpack.c.b16 %v453, %v450
    %v505 = vpack.c.b16 %v454, %v451
    %v506 = vpack.c.b16 %v458, %v455
    %v507 = vpack.c.b16 %v459, %v456
    %v508 = vpack.c.b16 %v460, %v457
    %v605 = vunpack.c.l.b16 %v253
    %v606 = vunpack.c.l.b16 %v254
    %v607 = vunpack.c.l.b16 %v255
    %v608 = vunpack.c.l.b16 %v256
    %v609 = vunpack.c.l.b16 %v257
    %v610 = vunpack.c.l.b16 %v258
    %v611 = vunpack.c.l.b16 %v259
    %v612 = vunpack.c.l.b16 %v260
    %v613 = vunpack.c.l.b16 %v261
    %v614 = vunpack.c.l.b16 %v262
    %v615 = vunpack.c.l.b16 %v263
    %v616 = vunpack.c.l.b16 %v264
    %v617 = vunpack.c.l.b16 %v265
    %v618 = vunpack.c.l.b16 %v266
    %v619 = vunpack.c.l.b16 %v267
    %v620 = vunpack.c.l.b16 %v268
    %v621 = vunpack.c.l.b16 %v269
    %v622 = vunpack.c.l.b16 %v270
    %v623 = vunpack.c.l.b16 %v271
    %v624 = vunpack.c.l.b16 %v272
    %v625 = vunpack.c.l.b16 %v273
    %v626 = vunpack.c.l.b16 %v274
    %v627 = vunpack.c.l.b16 %v275
    %v628 = vunpack.c.l.b16 %v276
    %v629 = vunpack.c.l.b16 %v277
    %v630 = vunpack.c.l.b16 %v278
    %v631 = vunpack.c.l.b16 %v279
    %v632 = vunpack.c.l.b16 %v280
    %v633 = vunpack.c.l.b16 %v281
    %v634 = vunpack.c.l.b16 %v282
    %v635 = vunpack.c.l.b16 %v283
    %v636 = vunpack.c.l.b16 %v284
    %v637 = vunpack.c.l.b16 %v285
    %v638 = vunpack.c.l.b16 %v286
    %v639 = vunpack.c.l.b16 %v287
    %v640 = vunpack.c.l.b16 %v288
    %v641 = vunpack.c.l.b16 %v289
    %v642 = vunpack.c.l.b16 %v290
    %v643 = vunpack.c.l.b16 %v291
    %v644 = vunpack.c.l.b16 %v292
    %v645 = vunpack.c.l.b16 %v293
    %v646 = vunpack.c.l.b16 %v294
    %v647 = vunpack.c.l.b16 %v295
    %v648 = vunpack.c.l.b16 %v296
    %v649 = vunpack.c.l.b16 %v297
    %v650 = vunpack.c.l.b16 %v298
    %v651 = vunpack.c.l.b16 %v299
    %v652 = vunpack.c.l.b16 %v300
    %v653 = vpack.c.b16 %v606, %v605
    %v654 = vpack.c.b16 %v608, %v607
    %v655 = vpack.c.b16 %v610, %v609
    %v656 = vpack.c.b16 %v612, %v611
    %v657 = vpack.c.b16 %v614, %v613
    %v658 = vpack.c.b16 %v616, %v615
    %v659 = vpack.c.b16 %v618, %v617
    %v660 = vpack.c.b16 %v620, %v619
    %v661 = vpack.c.b16 %v622, %v621
    %v662 = vpack.c.b16 %v624, %v623
    %v663 = vpack.c.b16 %v626, %v625
    %v664 = vpack.c.b16 %v628, %v627
    %v665 = vpack.c.b16 %v630, %v629
    %v666 = vpack.c.b16 %v632, %v631
    %v667 = vpack.c.b16 %v634, %v633
    %v668 = vpack.c.b16 %v636, %v635
    %v669 = vpack.c.b16 %v638, %v637
    %v670 = vpack.c.b16 %v640, %v639
    %v671 = vpack.c.b16 %v642, %v641
    %v672 = vpack.c.b16 %v644, %v643
    %v673 = vpack.c.b16 %v646, %v645
    %v674 = vpack.c.b16 %v648, %v647
    %v675 = vpack.c.b16 %v650, %v649
    %v676 = vpack.c.b16 %v652, %v651
    %701 = vmatpush.bf16.msra.mxu0 %v660
    %702 = vmatpush.bf16.msra.mxu0 %v659
    %703 = vmatpush.bf16.msra.mxu0 %v658
    %704 = vmatpush.bf16.msra.mxu0 %v657
    %705 = vmatpush.bf16.msra.mxu0 %v656
    %706 = vmatpush.bf16.msra.mxu0 %v655
    %707 = vmatpush.bf16.msra.mxu0 %v654
    %708 = vmatpush.bf16.msra.mxu0 %v653
    %709 = vmatmul.bf16.gmra.mxu0 %v461
    %v710 = vpop.f32.mrf.mxu0
    %v711 = vadd.f32 0.0, %v710
    %v712 = vpop.f32.mrf.mxu0
    %v713 = vadd.f32 0.0, %v712
    %714 = vmatmul.bf16.gmra.mxu0 %v464
    %v715 = vpop.f32.mrf.mxu0
    %v716 = vadd.f32 0.0, %v715
    %v717 = vpop.f32.mrf.mxu0
    %v718 = vadd.f32 0.0, %v717
    %719 = vmatmul.bf16.gmra.mxu0 %v467
    %v720 = vpop.f32.mrf.mxu0
    %v721 = vadd.f32 0.0, %v720
    %v722 = vpop.f32.mrf.mxu0
    %v723 = vadd.f32 0.0, %v722
    %724 = vmatmul.bf16.gmra.mxu0 %v470
    %v725 = vpop.f32.mrf.mxu0
    %v726 = vadd.f32 0.0, %v725
    %v727 = vpop.f32.mrf.mxu0
    %v728 = vadd.f32 0.0, %v727
    %729 = vmatmul.bf16.gmra.mxu0 %v473
    %v730 = vpop.f32.mrf.mxu0
    %v731 = vadd.f32 0.0, %v730
    %v732 = vpop.f32.mrf.mxu0
    %v733 = vadd.f32 0.0, %v732
    %734 = vmatmul.bf16.gmra.mxu0 %v476
    %v735 = vpop.f32.mrf.mxu0
    %v736 = vadd.f32 0.0, %v735
    %v737 = vpop.f32.mrf.mxu0
    %v738 = vadd.f32 0.0, %v737
    %739 = vmatmul.bf16.gmra.mxu0 %v479
    %v740 = vpop.f32.mrf.mxu0
    %v741 = vadd.f32 0.0, %v740
    %v742 = vpop.f32.mrf.mxu0
    %v743 = vadd.f32 0.0, %v742
    %744 = vmatmul.bf16.gmra.mxu0 %v482
    %v745 = vpop.f32.mrf.mxu0
    %v746 = vadd.f32 0.0, %v745
    %v747 = vpop.f32.mrf.mxu0
    %v748 = vadd.f32 0.0, %v747
    %749 = vmatmul.bf16.gmra.mxu0 %v485
    %v750 = vpop.f32.mrf.mxu0
    %v751 = vadd.f32 0.0, %v750
    %v752 = vpop.f32.mrf.mxu0
    %v753 = vadd.f32 0.0, %v752
    %754 = vmatmul.bf16.gmra.mxu0 %v488
    %v755 = vpop.f32.mrf.mxu0
    %v756 = vadd.f32 0.0, %v755
    %v757 = vpop.f32.mrf.mxu0
    %v758 = vadd.f32 0.0, %v757
    %759 = vmatmul.bf16.gmra.mxu0 %v491
    %v760 = vpop.f32.mrf.mxu0
    %v761 = vadd.f32 0.0, %v760
    %v762 = vpop.f32.mrf.mxu0
    %v763 = vadd.f32 0.0, %v762
    %764 = vmatmul.bf16.gmra.mxu0 %v494
    %v765 = vpop.f32.mrf.mxu0
    %v766 = vadd.f32 0.0, %v765
    %v767 = vpop.f32.mrf.mxu0
    %v768 = vadd.f32 0.0, %v767
    %769 = vmatmul.bf16.gmra.mxu0 %v497
    %v770 = vpop.f32.mrf.mxu0
    %v771 = vadd.f32 0.0, %v770
    %v772 = vpop.f32.mrf.mxu0
    %v773 = vadd.f32 0.0, %v772
    %774 = vmatmul.bf16.gmra.mxu0 %v500
    %v775 = vpop.f32.mrf.mxu0
    %v776 = vadd.f32 0.0, %v775
    %v777 = vpop.f32.mrf.mxu0
    %v778 = vadd.f32 0.0, %v777
    %779 = vmatmul.bf16.gmra.mxu0 %v503
    %v780 = vpop.f32.mrf.mxu0
    %v781 = vadd.f32 0.0, %v780
    %v782 = vpop.f32.mrf.mxu0
    %v783 = vadd.f32 0.0, %v782
    %784 = vmatmul.bf16.gmra.mxu0 %v506
    %v785 = vpop.f32.mrf.mxu0
    %v786 = vadd.f32 0.0, %v785
    %v787 = vpop.f32.mrf.mxu0
    %v788 = vadd.f32 0.0, %v787
    %789 = vdwg.mxu0
    %790 = vmatpush.bf16.msra.mxu0 %v668
    %791 = vmatpush.bf16.msra.mxu0 %v667
    %792 = vmatpush.bf16.msra.mxu0 %v666
    %793 = vmatpush.bf16.msra.mxu0 %v665
    %794 = vmatpush.bf16.msra.mxu0 %v664
    %795 = vmatpush.bf16.msra.mxu0 %v663
    %796 = vmatpush.bf16.msra.mxu0 %v662
    %797 = vmatpush.bf16.msra.mxu0 %v661
    %798 = vmatmul.bf16.gmra.mxu0 %v462
    %v799 = vpop.f32.mrf.mxu0
    %v800 = vadd.f32 %v711, %v799
    %v801 = vpop.f32.mrf.mxu0
    %v802 = vadd.f32 %v713, %v801
    %803 = vmatmul.bf16.gmra.mxu0 %v465
    %v804 = vpop.f32.mrf.mxu0
    %v805 = vadd.f32 %v716, %v804
    %v806 = vpop.f32.mrf.mxu0
    %v807 = vadd.f32 %v718, %v806
    %808 = vmatmul.bf16.gmra.mxu0 %v468
    %v809 = vpop.f32.mrf.mxu0
    %v810 = vadd.f32 %v721, %v809
    %v811 = vpop.f32.mrf.mxu0
    %v812 = vadd.f32 %v723, %v811
    %813 = vmatmul.bf16.gmra.mxu0 %v471
    %v814 = vpop.f32.mrf.mxu0
    %v815 = vadd.f32 %v726, %v814
    %v816 = vpop.f32.mrf.mxu0
    %v817 = vadd.f32 %v728, %v816
    %818 = vmatmul.bf16.gmra.mxu0 %v474
    %v819 = vpop.f32.mrf.mxu0
    %v820 = vadd.f32 %v731, %v819
    %v821 = vpop.f32.mrf.mxu0
    %v822 = vadd.f32 %v733, %v821
    %823 = vmatmul.bf16.gmra.mxu0 %v477
    %v824 = vpop.f32.mrf.mxu0
    %v825 = vadd.f32 %v736, %v824
    %v826 = vpop.f32.mrf.mxu0
    %v827 = vadd.f32 %v738, %v826
    %828 = vmatmul.bf16.gmra.mxu0 %v480
    %v829 = vpop.f32.mrf.mxu0
    %v830 = vadd.f32 %v741, %v829
    %v831 = vpop.f32.mrf.mxu0
    %v832 = vadd.f32 %v743, %v831
    %833 = vmatmul.bf16.gmra.mxu0 %v483
    %v834 = vpop.f32.mrf.mxu0
    %v835 = vadd.f32 %v746, %v834
    %v836 = vpop.f32.mrf.mxu0
    %v837 = vadd.f32 %v748, %v836
    %838 = vmatmul.bf16.gmra.mxu0 %v486
    %v839 = vpop.f32.mrf.mxu0
    %v840 = vadd.f32 %v751, %v839
    %v841 = vpop.f32.mrf.mxu0
    %v842 = vadd.f32 %v753, %v841
    %843 = vmatmul.bf16.gmra.mxu0 %v489
    %v844 = vpop.f32.mrf.mxu0
    %v845 = vadd.f32 %v756, %v844
    %v846 = vpop.f32.mrf.mxu0
    %v847 = vadd.f32 %v758, %v846
    %848 = vmatmul.bf16.gmra.mxu0 %v492
    %v849 = vpop.f32.mrf.mxu0
    %v850 = vadd.f32 %v761, %v849
    %v851 = vpop.f32.mrf.mxu0
    %v852 = vadd.f32 %v763, %v851
    %853 = vmatmul.bf16.gmra.mxu0 %v495
    %v854 = vpop.f32.mrf.mxu0
    %v855 = vadd.f32 %v766, %v854
    %v856 = vpop.f32.mrf.mxu0
    %v857 = vadd.f32 %v768, %v856
    %858 = vmatmul.bf16.gmra.mxu0 %v498
    %v859 = vpop.f32.mrf.mxu0
    %v860 = vadd.f32 %v771, %v859
    %v861 = vpop.f32.mrf.mxu0
    %v862 = vadd.f32 %v773, %v861
    %863 = vmatmul.bf16.gmra.mxu0 %v501
    %v864 = vpop.f32.mrf.mxu0
    %v865 = vadd.f32 %v776, %v864
    %v866 = vpop.f32.mrf.mxu0
    %v867 = vadd.f32 %v778, %v866
    %868 = vmatmul.bf16.gmra.mxu0 %v504
    %v869 = vpop.f32.mrf.mxu0
    %v870 = vadd.f32 %v781, %v869
    %v871 = vpop.f32.mrf.mxu0
    %v872 = vadd.f32 %v783, %v871
    %873 = vmatmul.bf16.gmra.mxu0 %v507
    %v874 = vpop.f32.mrf.mxu0
    %v875 = vadd.f32 %v786, %v874
    %v876 = vpop.f32.mrf.mxu0
    %v877 = vadd.f32 %v788, %v876
    %878 = vdwg.mxu0
    %879 = vmatpush.bf16.msra.mxu0 %v676
    %880 = vmatpush.bf16.msra.mxu0 %v675
    %881 = vmatpush.bf16.msra.mxu0 %v674
    %882 = vmatpush.bf16.msra.mxu0 %v673
    %883 = vmatpush.bf16.msra.mxu0 %v672
    %884 = vmatpush.bf16.msra.mxu0 %v671
    %885 = vmatpush.bf16.msra.mxu0 %v670
    %886 = vmatpush.bf16.msra.mxu0 %v669
    %887 = vmatmul.bf16.gmra.mxu0 %v463
    %v888 = vpop.f32.mrf.mxu0
    %v889 = vadd.f32 %v800, %v888
    %v890 = vpop.f32.mrf.mxu0
    %v891 = vadd.f32 %v802, %v890
    %892 = vmatmul.bf16.gmra.mxu0 %v466
    %v893 = vpop.f32.mrf.mxu0
    %v894 = vadd.f32 %v805, %v893
    %v895 = vpop.f32.mrf.mxu0
    %v896 = vadd.f32 %v807, %v895
    %897 = vmatmul.bf16.gmra.mxu0 %v469
    %v898 = vpop.f32.mrf.mxu0
    %v899 = vadd.f32 %v810, %v898
    %v900 = vpop.f32.mrf.mxu0
    %v901 = vadd.f32 %v812, %v900
    %902 = vmatmul.bf16.gmra.mxu0 %v472
    %v903 = vpop.f32.mrf.mxu0
    %v904 = vadd.f32 %v815, %v903
    %v905 = vpop.f32.mrf.mxu0
    %v906 = vadd.f32 %v817, %v905
    %907 = vmatmul.bf16.gmra.mxu0 %v475
    %v908 = vpop.f32.mrf.mxu0
    %v909 = vadd.f32 %v820, %v908
    %v910 = vpop.f32.mrf.mxu0
    %v911 = vadd.f32 %v822, %v910
    %912 = vmatmul.bf16.gmra.mxu0 %v478
    %v913 = vpop.f32.mrf.mxu0
    %v914 = vadd.f32 %v825, %v913
    %v915 = vpop.f32.mrf.mxu0
    %v916 = vadd.f32 %v827, %v915
    %917 = vmatmul.bf16.gmra.mxu0 %v481
    %v918 = vpop.f32.mrf.mxu0
    %v919 = vadd.f32 %v830, %v918
    %v920 = vpop.f32.mrf.mxu0
    %v921 = vadd.f32 %v832, %v920
    %922 = vmatmul.bf16.gmra.mxu0 %v484
    %v923 = vpop.f32.mrf.mxu0
    %v924 = vadd.f32 %v835, %v923
    %v925 = vpop.f32.mrf.mxu0
    %v926 = vadd.f32 %v837, %v925
    %927 = vmatmul.bf16.gmra.mxu0 %v487
    %v928 = vpop.f32.mrf.mxu0
    %v929 = vadd.f32 %v840, %v928
    %v930 = vpop.f32.mrf.mxu0
    %v931 = vadd.f32 %v842, %v930
    %932 = vmatmul.bf16.gmra.mxu0 %v490
    %v933 = vpop.f32.mrf.mxu0
    %v934 = vadd.f32 %v845, %v933
    %v935 = vpop.f32.mrf.mxu0
    %v936 = vadd.f32 %v847, %v935
    %937 = vmatmul.bf16.gmra.mxu0 %v493
    %v938 = vpop.f32.mrf.mxu0
    %v939 = vadd.f32 %v850, %v938
    %v940 = vpop.f32.mrf.mxu0
    %v941 = vadd.f32 %v852, %v940
    %942 = vmatmul.bf16.gmra.mxu0 %v496
    %v943 = vpop.f32.mrf.mxu0
    %v944 = vadd.f32 %v855, %v943
    %v945 = vpop.f32.mrf.mxu0
    %v946 = vadd.f32 %v857, %v945
    %947 = vmatmul.bf16.gmra.mxu0 %v499
    %v948 = vpop.f32.mrf.mxu0
    %v949 = vadd.f32 %v860, %v948
    %v950 = vpop.f32.mrf.mxu0
    %v951 = vadd.f32 %v862, %v950
    %952 = vmatmul.bf16.gmra.mxu0 %v502
    %v953 = vpop.f32.mrf.mxu0
    %v954 = vadd.f32 %v865, %v953
    %v955 = vpop.f32.mrf.mxu0
    %v956 = vadd.f32 %v867, %v955
    %957 = vmatmul.bf16.gmra.mxu0 %v505
    %v958 = vpop.f32.mrf.mxu0
    %v959 = vadd.f32 %v870, %v958
    %v960 = vpop.f32.mrf.mxu0
    %v961 = vadd.f32 %v872, %v960
    %962 = vmatmul.bf16.gmra.mxu0 %v508
    %v963 = vpop.f32.mrf.mxu0
    %v964 = vadd.f32 %v875, %v963
    %v965 = vpop.f32.mrf.mxu0
    %v966 = vadd.f32 %v877, %v965
    %967 = vdwg.mxu0
    %v1032 = vunpack.c.l.b16 %v72
    %v1033 = vunpack.c.h.b16 %v72
    %v1034 = vunpack.c.l.b16 %v73
    %v1035 = vunpack.c.l.b16 %v74
    %v1036 = vunpack.c.h.b16 %v74
    %v1037 = vunpack.c.l.b16 %v75
    %v1038 = vunpack.c.l.b16 %v76
    %v1039 = vunpack.c.h.b16 %v76
    %v1040 = vunpack.c.l.b16 %v77
    %v1041 = vunpack.c.l.b16 %v78
    %v1042 = vunpack.c.h.b16 %v78
    %v1043 = vunpack.c.l.b16 %v79
    %v1044 = vunpack.c.l.b16 %v80
    %v1045 = vunpack.c.h.b16 %v80
    %v1046 = vunpack.c.l.b16 %v81
    %v1047 = vunpack.c.l.b16 %v82
    %v1048 = vunpack.c.h.b16 %v82
    %v1049 = vunpack.c.l.b16 %v83
    %v1050 = vunpack.c.l.b16 %v84
    %v1051 = vunpack.c.h.b16 %v84
    %v1052 = vunpack.c.l.b16 %v85
    %v1053 = vunpack.c.l.b16 %v86
    %v1054 = vunpack.c.h.b16 %v86
    %v1055 = vunpack.c.l.b16 %v87
    %v1056 = vunpack.c.l.b16 %v88
    %v1057 = vunpack.c.h.b16 %v88
    %v1058 = vunpack.c.l.b16 %v89
    %v1059 = vunpack.c.l.b16 %v90
    %v1060 = vunpack.c.h.b16 %v90
    %v1061 = vunpack.c.l.b16 %v91
    %v1062 = vunpack.c.l.b16 %v92
    %v1063 = vunpack.c.h.b16 %v92
    %v1064 = vunpack.c.l.b16 %v93
    %v1065 = vunpack.c.l.b16 %v94
    %v1066 = vunpack.c.h.b16 %v94
    %v1067 = vunpack.c.l.b16 %v95
    %v1068 = vunpack.c.l.b16 %v96
    %v1069 = vunpack.c.h.b16 %v96
    %v1070 = vunpack.c.l.b16 %v97
    %v1071 = vunpack.c.l.b16 %v98
    %v1072 = vunpack.c.h.b16 %v98
    %v1073 = vunpack.c.l.b16 %v99
    %v1074 = vunpack.c.l.b16 %v100
    %v1075 = vunpack.c.h.b16 %v100
    %v1076 = vunpack.c.l.b16 %v101
    %v1077 = vunpack.c.l.b16 %v102
    %v1078 = vunpack.c.h.b16 %v102
    %v1079 = vunpack.c.l.b16 %v103
    %v1080 = vunpack.c.l.b16 %v104
    %v1081 = vunpack.c.h.b16 %v104
    %v1082 = vunpack.c.l.b16 %v105
    %v1083 = vunpack.c.l.b16 %v106
    %v1084 = vunpack.c.h.b16 %v106
    %v1085 = vunpack.c.l.b16 %v107
    %v1086 = vunpack.c.l.b16 %v108
    %v1087 = vunpack.c.h.b16 %v108
    %v1088 = vunpack.c.l.b16 %v109
    %v1089 = vunpack.c.l.b16 %v110
    %v1090 = vunpack.c.h.b16 %v110
    %v1091 = vunpack.c.l.b16 %v111
    %v1092 = vunpack.c.l.b16 %v112
    %v1093 = vunpack.c.h.b16 %v112
    %v1094 = vunpack.c.l.b16 %v113
    %v1095 = vunpack.c.l.b16 %v114
    %v1096 = vunpack.c.h.b16 %v114
    %v1097 = vunpack.c.l.b16 %v115
    %v1098 = vunpack.c.l.b16 %v116
    %v1099 = vunpack.c.h.b16 %v116
    %v1100 = vunpack.c.l.b16 %v117
    %v1101 = vunpack.c.l.b16 %v118
    %v1102 = vunpack.c.h.b16 %v118
    %v1103 = vunpack.c.l.b16 %v119
    %v1104 = vunpack.c.l.b16 %v120
    %v1105 = vunpack.c.h.b16 %v120
    %v1106 = vunpack.c.l.b16 %v121
    %v1107 = vunpack.c.l.b16 %v122
    %v1108 = vunpack.c.h.b16 %v122
    %v1109 = vunpack.c.l.b16 %v123
    %v1110 = vunpack.c.l.b16 %v124
    %v1111 = vunpack.c.h.b16 %v124
    %v1112 = vunpack.c.l.b16 %v125
    %v1113 = vunpack.c.l.b16 %v126
    %v1114 = vunpack.c.h.b16 %v126
    %v1115 = vunpack.c.l.b16 %v127
    %v1116 = vunpack.c.l.b16 %v128
    %v1117 = vunpack.c.h.b16 %v128
    %v1118 = vunpack.c.l.b16 %v129
    %v1119 = vunpack.c.l.b16 %v130
    %v1120 = vunpack.c.h.b16 %v130
    %v1121 = vunpack.c.l.b16 %v131
    %v1122 = vunpack.c.l.b16 %v132
    %v1123 = vunpack.c.h.b16 %v132
    %v1124 = vunpack.c.l.b16 %v133
    %v1125 = vunpack.c.l.b16 %v134
    %v1126 = vunpack.c.h.b16 %v134
    %v1127 = vunpack.c.l.b16 %v135
    %v1128 = vpack.c.b16 %v1035, %v1032
    %v1129 = vpack.c.b16 %v1036, %v1033
    %v1130 = vpack.c.b16 %v1037, %v1034
    %v1131 = vpack.c.b16 %v1041, %v1038
    %v1132 = vpack.c.b16 %v1042, %v1039
    %v1133 = vpack.c.b16 %v1043, %v1040
    %v1134 = vpack.c.b16 %v1047, %v1044
    %v1135 = vpack.c.b16 %v1048, %v1045
    %v1136 = vpack.c.b16 %v1049, %v1046
    %v1137 = vpack.c.b16 %v1053, %v1050
    %v1138 = vpack.c.b16 %v1054, %v1051
    %v1139 = vpack.c.b16 %v1055, %v1052
    %v1140 = vpack.c.b16 %v1059, %v1056
    %v1141 = vpack.c.b16 %v1060, %v1057
    %v1142 = vpack.c.b16 %v1061, %v1058
    %v1143 = vpack.c.b16 %v1065, %v1062
    %v1144 = vpack.c.b16 %v1066, %v1063
    %v1145 = vpack.c.b16 %v1067, %v1064
    %v1146 = vpack.c.b16 %v1071, %v1068
    %v1147 = vpack.c.b16 %v1072, %v1069
    %v1148 = vpack.c.b16 %v1073, %v1070
    %v1149 = vpack.c.b16 %v1077, %v1074
    %v1150 = vpack.c.b16 %v1078, %v1075
    %v1151 = vpack.c.b16 %v1079, %v1076
    %v1152 = vpack.c.b16 %v1083, %v1080
    %v1153 = vpack.c.b16 %v1084, %v1081
    %v1154 = vpack.c.b16 %v1085, %v1082
    %v1155 = vpack.c.b16 %v1089, %v1086
    %v1156 = vpack.c.b16 %v1090, %v1087
    %v1157 = vpack.c.b16 %v1091, %v1088
    %v1158 = vpack.c.b16 %v1095, %v1092
    %v1159 = vpack.c.b16 %v1096, %v1093
    %v1160 = vpack.c.b16 %v1097, %v1094
    %v1161 = vpack.c.b16 %v1101, %v1098
    %v1162 = vpack.c.b16 %v1102, %v1099
    %v1163 = vpack.c.b16 %v1103, %v1100
    %v1164 = vpack.c.b16 %v1107, %v1104
    %v1165 = vpack.c.b16 %v1108, %v1105
    %v1166 = vpack.c.b16 %v1109, %v1106
    %v1167 = vpack.c.b16 %v1113, %v1110
    %v1168 = vpack.c.b16 %v1114, %v1111
    %v1169 = vpack.c.b16 %v1115, %v1112
    %v1170 = vpack.c.b16 %v1119, %v1116
    %v1171 = vpack.c.b16 %v1120, %v1117
    %v1172 = vpack.c.b16 %v1121, %v1118
    %v1173 = vpack.c.b16 %v1125, %v1122
    %v1174 = vpack.c.b16 %v1126, %v1123
    %v1175 = vpack.c.b16 %v1127, %v1124
    %v1272 = vunpack.c.l.b16 %v136
    %v1273 = vunpack.c.l.b16 %v137
    %v1274 = vunpack.c.l.b16 %v138
    %v1275 = vunpack.c.l.b16 %v139
    %v1276 = vunpack.c.l.b16 %v140
    %v1277 = vunpack.c.l.b16 %v141
    %v1278 = vunpack.c.l.b16 %v142
    %v1279 = vunpack.c.l.b16 %v143
    %v1280 = vunpack.c.l.b16 %v144
    %v1281 = vunpack.c.l.b16 %v145
    %v1282 = vunpack.c.l.b16 %v146
    %v1283 = vunpack.c.l.b16 %v147
    %v1284 = vunpack.c.l.b16 %v148
    %v1285 = vunpack.c.l.b16 %v149
    %v1286 = vunpack.c.l.b16 %v150
    %v1287 = vunpack.c.l.b16 %v151
    %v1288 = vunpack.c.l.b16 %v152
    %v1289 = vunpack.c.l.b16 %v153
    %v1290 = vunpack.c.l.b16 %v154
    %v1291 = vunpack.c.l.b16 %v155
    %v1292 = vunpack.c.l.b16 %v156
    %v1293 = vunpack.c.l.b16 %v157
    %v1294 = vunpack.c.l.b16 %v158
    %v1295 = vunpack.c.l.b16 %v159
    %v1296 = vunpack.c.l.b16 %v160
    %v1297 = vunpack.c.l.b16 %v161
    %v1298 = vunpack.c.l.b16 %v162
    %v1299 = vunpack.c.l.b16 %v163
    %v1300 = vunpack.c.l.b16 %v164
    %v1301 = vunpack.c.l.b16 %v165
    %v1302 = vunpack.c.l.b16 %v166
    %v1303 = vunpack.c.l.b16 %v167
    %v1304 = vunpack.c.l.b16 %v168
    %v1305 = vunpack.c.l.b16 %v169
    %v1306 = vunpack.c.l.b16 %v170
    %v1307 = vunpack.c.l.b16 %v171
    %v1308 = vunpack.c.l.b16 %v172
    %v1309 = vunpack.c.l.b16 %v173
    %v1310 = vunpack.c.l.b16 %v174
    %v1311 = vunpack.c.l.b16 %v175
    %v1312 = vunpack.c.l.b16 %v176
    %v1313 = vunpack.c.l.b16 %v177
    %v1314 = vunpack.c.l.b16 %v178
    %v1315 = vunpack.c.l.b16 %v179
    %v1316 = vunpack.c.l.b16 %v180
    %v1317 = vunpack.c.l.b16 %v181
    %v1318 = vunpack.c.l.b16 %v182
    %v1319 = vunpack.c.l.b16 %v183
    %v1320 = vpack.c.b16 %v1273, %v1272
    %v1321 = vpack.c.b16 %v1275, %v1274
    %v1322 = vpack.c.b16 %v1277, %v1276
    %v1323 = vpack.c.b16 %v1279, %v1278
    %v1324 = vpack.c.b16 %v1281, %v1280
    %v1325 = vpack.c.b16 %v1283, %v1282
    %v1326 = vpack.c.b16 %v1285, %v1284
    %v1327 = vpack.c.b16 %v1287, %v1286
    %v1328 = vpack.c.b16 %v1289, %v1288
    %v1329 = vpack.c.b16 %v1291, %v1290
    %v1330 = vpack.c.b16 %v1293, %v1292
    %v1331 = vpack.c.b16 %v1295, %v1294
    %v1332 = vpack.c.b16 %v1297, %v1296
    %v1333 = vpack.c.b16 %v1299, %v1298
    %v1334 = vpack.c.b16 %v1301, %v1300
    %v1335 = vpack.c.b16 %v1303, %v1302
    %v1336 = vpack.c.b16 %v1305, %v1304
    %v1337 = vpack.c.b16 %v1307, %v1306
    %v1338 = vpack.c.b16 %v1309, %v1308
    %v1339 = vpack.c.b16 %v1311, %v1310
    %v1340 = vpack.c.b16 %v1313, %v1312
    %v1341 = vpack.c.b16 %v1315, %v1314
    %v1342 = vpack.c.b16 %v1317, %v1316
    %v1343 = vpack.c.b16 %v1319, %v1318
    %1368 = vmatpush.bf16.msra.mxu0 %v1327
    %1369 = vmatpush.bf16.msra.mxu0 %v1326
    %1370 = vmatpush.bf16.msra.mxu0 %v1325
    %1371 = vmatpush.bf16.msra.mxu0 %v1324
    %1372 = vmatpush.bf16.msra.mxu0 %v1323
    %1373 = vmatpush.bf16.msra.mxu0 %v1322
    %1374 = vmatpush.bf16.msra.mxu0 %v1321
    %1375 = vmatpush.bf16.msra.mxu0 %v1320
    %1376 = vmatmul.bf16.gmra.mxu0 %v1128
    %v1377 = vpop.f32.mrf.mxu0
    %v1378 = vadd.f32 %v889, %v1377
    %v1379 = vpop.f32.mrf.mxu0
    %v1380 = vadd.f32 %v891, %v1379
    %1381 = vmatmul.bf16.gmra.mxu0 %v1131
    %v1382 = vpop.f32.mrf.mxu0
    %v1383 = vadd.f32 %v894, %v1382
    %v1384 = vpop.f32.mrf.mxu0
    %v1385 = vadd.f32 %v896, %v1384
    %1386 = vmatmul.bf16.gmra.mxu0 %v1134
    %v1387 = vpop.f32.mrf.mxu0
    %v1388 = vadd.f32 %v899, %v1387
    %v1389 = vpop.f32.mrf.mxu0
    %v1390 = vadd.f32 %v901, %v1389
    %1391 = vmatmul.bf16.gmra.mxu0 %v1137
    %v1392 = vpop.f32.mrf.mxu0
    %v1393 = vadd.f32 %v904, %v1392
    %v1394 = vpop.f32.mrf.mxu0
    %v1395 = vadd.f32 %v906, %v1394
    %1396 = vmatmul.bf16.gmra.mxu0 %v1140
    %v1397 = vpop.f32.mrf.mxu0
    %v1398 = vadd.f32 %v909, %v1397
    %v1399 = vpop.f32.mrf.mxu0
    %v1400 = vadd.f32 %v911, %v1399
    %1401 = vmatmul.bf16.gmra.mxu0 %v1143
    %v1402 = vpop.f32.mrf.mxu0
    %v1403 = vadd.f32 %v914, %v1402
    %v1404 = vpop.f32.mrf.mxu0
    %v1405 = vadd.f32 %v916, %v1404
    %1406 = vmatmul.bf16.gmra.mxu0 %v1146
    %v1407 = vpop.f32.mrf.mxu0
    %v1408 = vadd.f32 %v919, %v1407
    %v1409 = vpop.f32.mrf.mxu0
    %v1410 = vadd.f32 %v921, %v1409
    %1411 = vmatmul.bf16.gmra.mxu0 %v1149
    %v1412 = vpop.f32.mrf.mxu0
    %v1413 = vadd.f32 %v924, %v1412
    %v1414 = vpop.f32.mrf.mxu0
    %v1415 = vadd.f32 %v926, %v1414
    %1416 = vmatmul.bf16.gmra.mxu0 %v1152
    %v1417 = vpop.f32.mrf.mxu0
    %v1418 = vadd.f32 %v929, %v1417
    %v1419 = vpop.f32.mrf.mxu0
    %v1420 = vadd.f32 %v931, %v1419
    %1421 = vmatmul.bf16.gmra.mxu0 %v1155
    %v1422 = vpop.f32.mrf.mxu0
    %v1423 = vadd.f32 %v934, %v1422
    %v1424 = vpop.f32.mrf.mxu0
    %v1425 = vadd.f32 %v936, %v1424
    %1426 = vmatmul.bf16.gmra.mxu0 %v1158
    %v1427 = vpop.f32.mrf.mxu0
    %v1428 = vadd.f32 %v939, %v1427
    %v1429 = vpop.f32.mrf.mxu0
    %v1430 = vadd.f32 %v941, %v1429
    %1431 = vmatmul.bf16.gmra.mxu0 %v1161
    %v1432 = vpop.f32.mrf.mxu0
    %v1433 = vadd.f32 %v944, %v1432
    %v1434 = vpop.f32.mrf.mxu0
    %v1435 = vadd.f32 %v946, %v1434
    %1436 = vmatmul.bf16.gmra.mxu0 %v1164
    %v1437 = vpop.f32.mrf.mxu0
    %v1438 = vadd.f32 %v949, %v1437
    %v1439 = vpop.f32.mrf.mxu0
    %v1440 = vadd.f32 %v951, %v1439
    %1441 = vmatmul.bf16.gmra.mxu0 %v1167
    %v1442 = vpop.f32.mrf.mxu0
    %v1443 = vadd.f32 %v954, %v1442
    %v1444 = vpop.f32.mrf.mxu0
    %v1445 = vadd.f32 %v956, %v1444
    %1446 = vmatmul.bf16.gmra.mxu0 %v1170
    %v1447 = vpop.f32.mrf.mxu0
    %v1448 = vadd.f32 %v959, %v1447
    %v1449 = vpop.f32.mrf.mxu0
    %v1450 = vadd.f32 %v961, %v1449
    %1451 = vmatmul.bf16.gmra.mxu0 %v1173
    %v1452 = vpop.f32.mrf.mxu0
    %v1453 = vadd.f32 %v964, %v1452
    %v1454 = vpop.f32.mrf.mxu0
    %v1455 = vadd.f32 %v966, %v1454
    %1456 = vdwg.mxu0
    %1457 = vmatpush.bf16.msra.mxu0 %v1335
    %1458 = vmatpush.bf16.msra.mxu0 %v1334
    %1459 = vmatpush.bf16.msra.mxu0 %v1333
    %1460 = vmatpush.bf16.msra.mxu0 %v1332
    %1461 = vmatpush.bf16.msra.mxu0 %v1331
    %1462 = vmatpush.bf16.msra.mxu0 %v1330
    %1463 = vmatpush.bf16.msra.mxu0 %v1329
    %1464 = vmatpush.bf16.msra.mxu0 %v1328
    %1465 = vmatmul.bf16.gmra.mxu0 %v1129
    %v1466 = vpop.f32.mrf.mxu0
    %v1467 = vadd.f32 %v1378, %v1466
    %v1468 = vpop.f32.mrf.mxu0
    %v1469 = vadd.f32 %v1380, %v1468
    %1470 = vmatmul.bf16.gmra.mxu0 %v1132
    %v1471 = vpop.f32.mrf.mxu0
    %v1472 = vadd.f32 %v1383, %v1471
    %v1473 = vpop.f32.mrf.mxu0
    %v1474 = vadd.f32 %v1385, %v1473
    %1475 = vmatmul.bf16.gmra.mxu0 %v1135
    %v1476 = vpop.f32.mrf.mxu0
    %v1477 = vadd.f32 %v1388, %v1476
    %v1478 = vpop.f32.mrf.mxu0
    %v1479 = vadd.f32 %v1390, %v1478
    %1480 = vmatmul.bf16.gmra.mxu0 %v1138
    %v1481 = vpop.f32.mrf.mxu0
    %v1482 = vadd.f32 %v1393, %v1481
    %v1483 = vpop.f32.mrf.mxu0
    %v1484 = vadd.f32 %v1395, %v1483
    %1485 = vmatmul.bf16.gmra.mxu0 %v1141
    %v1486 = vpop.f32.mrf.mxu0
    %v1487 = vadd.f32 %v1398, %v1486
    %v1488 = vpop.f32.mrf.mxu0
    %v1489 = vadd.f32 %v1400, %v1488
    %1490 = vmatmul.bf16.gmra.mxu0 %v1144
    %v1491 = vpop.f32.mrf.mxu0
    %v1492 = vadd.f32 %v1403, %v1491
    %v1493 = vpop.f32.mrf.mxu0
    %v1494 = vadd.f32 %v1405, %v1493
    %1495 = vmatmul.bf16.gmra.mxu0 %v1147
    %v1496 = vpop.f32.mrf.mxu0
    %v1497 = vadd.f32 %v1408, %v1496
    %v1498 = vpop.f32.mrf.mxu0
    %v1499 = vadd.f32 %v1410, %v1498
    %1500 = vmatmul.bf16.gmra.mxu0 %v1150
    %v1501 = vpop.f32.mrf.mxu0
    %v1502 = vadd.f32 %v1413, %v1501
    %v1503 = vpop.f32.mrf.mxu0
    %v1504 = vadd.f32 %v1415, %v1503
    %1505 = vmatmul.bf16.gmra.mxu0 %v1153
    %v1506 = vpop.f32.mrf.mxu0
    %v1507 = vadd.f32 %v1418, %v1506
    %v1508 = vpop.f32.mrf.mxu0
    %v1509 = vadd.f32 %v1420, %v1508
    %1510 = vmatmul.bf16.gmra.mxu0 %v1156
    %v1511 = vpop.f32.mrf.mxu0
    %v1512 = vadd.f32 %v1423, %v1511
    %v1513 = vpop.f32.mrf.mxu0
    %v1514 = vadd.f32 %v1425, %v1513
    %1515 = vmatmul.bf16.gmra.mxu0 %v1159
    %v1516 = vpop.f32.mrf.mxu0
    %v1517 = vadd.f32 %v1428, %v1516
    %v1518 = vpop.f32.mrf.mxu0
    %v1519 = vadd.f32 %v1430, %v1518
    %1520 = vmatmul.bf16.gmra.mxu0 %v1162
    %v1521 = vpop.f32.mrf.mxu0
    %v1522 = vadd.f32 %v1433, %v1521
    %v1523 = vpop.f32.mrf.mxu0
    %v1524 = vadd.f32 %v1435, %v1523
    %1525 = vmatmul.bf16.gmra.mxu0 %v1165
    %v1526 = vpop.f32.mrf.mxu0
    %v1527 = vadd.f32 %v1438, %v1526
    %v1528 = vpop.f32.mrf.mxu0
    %v1529 = vadd.f32 %v1440, %v1528
    %1530 = vmatmul.bf16.gmra.mxu0 %v1168
    %v1531 = vpop.f32.mrf.mxu0
    %v1532 = vadd.f32 %v1443, %v1531
    %v1533 = vpop.f32.mrf.mxu0
    %v1534 = vadd.f32 %v1445, %v1533
    %1535 = vmatmul.bf16.gmra.mxu0 %v1171
    %v1536 = vpop.f32.mrf.mxu0
    %v1537 = vadd.f32 %v1448, %v1536
    %v1538 = vpop.f32.mrf.mxu0
    %v1539 = vadd.f32 %v1450, %v1538
    %1540 = vmatmul.bf16.gmra.mxu0 %v1174
    %v1541 = vpop.f32.mrf.mxu0
    %v1542 = vadd.f32 %v1453, %v1541
    %v1543 = vpop.f32.mrf.mxu0
    %v1544 = vadd.f32 %v1455, %v1543
    %1545 = vdwg.mxu0
    %1546 = vmatpush.bf16.msra.mxu0 %v1343
    %1547 = vmatpush.bf16.msra.mxu0 %v1342
    %1548 = vmatpush.bf16.msra.mxu0 %v1341
    %1549 = vmatpush.bf16.msra.mxu0 %v1340
    %1550 = vmatpush.bf16.msra.mxu0 %v1339
    %1551 = vmatpush.bf16.msra.mxu0 %v1338
    %1552 = vmatpush.bf16.msra.mxu0 %v1337
    %1553 = vmatpush.bf16.msra.mxu0 %v1336
    %1554 = vmatmul.bf16.gmra.mxu0 %v1130
    %v1555 = vpop.f32.mrf.mxu0
    %v1556 = vadd.f32 %v1467, %v1555
    %v1557 = vpop.f32.mrf.mxu0
    %v1558 = vadd.f32 %v1469, %v1557
    %1559 = vmatmul.bf16.gmra.mxu0 %v1133
    %v1560 = vpop.f32.mrf.mxu0
    %v1561 = vadd.f32 %v1472, %v1560
    %v1562 = vpop.f32.mrf.mxu0
    %v1563 = vadd.f32 %v1474, %v1562
    %1564 = vmatmul.bf16.gmra.mxu0 %v1136
    %v1565 = vpop.f32.mrf.mxu0
    %v1566 = vadd.f32 %v1477, %v1565
    %v1567 = vpop.f32.mrf.mxu0
    %v1568 = vadd.f32 %v1479, %v1567
    %1569 = vmatmul.bf16.gmra.mxu0 %v1139
    %v1570 = vpop.f32.mrf.mxu0
    %v1571 = vadd.f32 %v1482, %v1570
    %v1572 = vpop.f32.mrf.mxu0
    %v1573 = vadd.f32 %v1484, %v1572
    %1574 = vmatmul.bf16.gmra.mxu0 %v1142
    %v1575 = vpop.f32.mrf.mxu0
    %v1576 = vadd.f32 %v1487, %v1575
    %v1577 = vpop.f32.mrf.mxu0
    %v1578 = vadd.f32 %v1489, %v1577
    %1579 = vmatmul.bf16.gmra.mxu0 %v1145
    %v1580 = vpop.f32.mrf.mxu0
    %v1581 = vadd.f32 %v1492, %v1580
    %v1582 = vpop.f32.mrf.mxu0
    %v1583 = vadd.f32 %v1494, %v1582
    %1584 = vmatmul.bf16.gmra.mxu0 %v1148
    %v1585 = vpop.f32.mrf.mxu0
    %v1586 = vadd.f32 %v1497, %v1585
    %v1587 = vpop.f32.mrf.mxu0
    %v1588 = vadd.f32 %v1499, %v1587
    %1589 = vmatmul.bf16.gmra.mxu0 %v1151
    %v1590 = vpop.f32.mrf.mxu0
    %v1591 = vadd.f32 %v1502, %v1590
    %v1592 = vpop.f32.mrf.mxu0
    %v1593 = vadd.f32 %v1504, %v1592
    %1594 = vmatmul.bf16.gmra.mxu0 %v1154
    %v1595 = vpop.f32.mrf.mxu0
    %v1596 = vadd.f32 %v1507, %v1595
    %v1597 = vpop.f32.mrf.mxu0
    %v1598 = vadd.f32 %v1509, %v1597
    %1599 = vmatmul.bf16.gmra.mxu0 %v1157
    %v1600 = vpop.f32.mrf.mxu0
    %v1601 = vadd.f32 %v1512, %v1600
    %v1602 = vpop.f32.mrf.mxu0
    %v1603 = vadd.f32 %v1514, %v1602
    %1604 = vmatmul.bf16.gmra.mxu0 %v1160
    %v1605 = vpop.f32.mrf.mxu0
    %v1606 = vadd.f32 %v1517, %v1605
    %v1607 = vpop.f32.mrf.mxu0
    %v1608 = vadd.f32 %v1519, %v1607
    %1609 = vmatmul.bf16.gmra.mxu0 %v1163
    %v1610 = vpop.f32.mrf.mxu0
    %v1611 = vadd.f32 %v1522, %v1610
    %v1612 = vpop.f32.mrf.mxu0
    %v1613 = vadd.f32 %v1524, %v1612
    %1614 = vmatmul.bf16.gmra.mxu0 %v1166
    %v1615 = vpop.f32.mrf.mxu0
    %v1616 = vadd.f32 %v1527, %v1615
    %v1617 = vpop.f32.mrf.mxu0
    %v1618 = vadd.f32 %v1529, %v1617
    %1619 = vmatmul.bf16.gmra.mxu0 %v1169
    %v1620 = vpop.f32.mrf.mxu0
    %v1621 = vadd.f32 %v1532, %v1620
    %v1622 = vpop.f32.mrf.mxu0
    %v1623 = vadd.f32 %v1534, %v1622
    %1624 = vmatmul.bf16.gmra.mxu0 %v1172
    %v1625 = vpop.f32.mrf.mxu0
    %v1626 = vadd.f32 %v1537, %v1625
    %v1627 = vpop.f32.mrf.mxu0
    %v1628 = vadd.f32 %v1539, %v1627
    %1629 = vmatmul.bf16.gmra.mxu0 %v1175
    %v1630 = vpop.f32.mrf.mxu0
    %v1631 = vadd.f32 %v1542, %v1630
    %v1632 = vpop.f32.mrf.mxu0
    %v1633 = vadd.f32 %v1544, %v1632
    %1634 = vdwg.mxu0
    %s1635 = sadd.s32 %s68, 2
    %s1636 = smul.u32 %s1635, 6
    %s1637 = smul.addr %s1636, 4
    %s1638 = scalar_lea.vmem [#allocation2], %s1637
    %v1639 = vld [vmem:[%s1638] sm:$0xff]
    %v1640 = vld [vmem:[%s1638 + $0x8] sm:$0xf]
    %v1641 = vld [vmem:[%s1638 + $0xc] sm:$0xff]
    %v1642 = vld [vmem:[%s1638 + $0x14] sm:$0xf]
    %v1643 = vld [vmem:[%s1638 + $0x18] sm:$0xff]
    %v1644 = vld [vmem:[%s1638 + $0x20] sm:$0xf]
    %v1645 = vld [vmem:[%s1638 + $0x24] sm:$0xff]
    %v1646 = vld [vmem:[%s1638 + $0x2c] sm:$0xf]
    %v1647 = vld [vmem:[%s1638 + $0x30] sm:$0xff]
    %v1648 = vld [vmem:[%s1638 + $0x38] sm:$0xf]
    %v1649 = vld [vmem:[%s1638 + $0x3c] sm:$0xff]
    %v1650 = vld [vmem:[%s1638 + $0x44] sm:$0xf]
    %v1651 = vld [vmem:[%s1638 + $0x48] sm:$0xff]
    %v1652 = vld [vmem:[%s1638 + $0x50] sm:$0xf]
    %v1653 = vld [vmem:[%s1638 + $0x54] sm:$0xff]
    %v1654 = vld [vmem:[%s1638 + $0x5c] sm:$0xf]
    %v1655 = vld [vmem:[%s1638 + $0x60] sm:$0xff]
    %v1656 = vld [vmem:[%s1638 + $0x68] sm:$0xf]
    %v1657 = vld [vmem:[%s1638 + $0x6c] sm:$0xff]
    %v1658 = vld [vmem:[%s1638 + $0x74] sm:$0xf]
    %v1659 = vld [vmem:[%s1638 + $0x78] sm:$0xff]
    %v1660 = vld [vmem:[%s1638 + $0x80] sm:$0xf]
    %v1661 = vld [vmem:[%s1638 + $0x84] sm:$0xff]
    %v1662 = vld [vmem:[%s1638 + $0x8c] sm:$0xf]
    %v1663 = vld [vmem:[%s1638 + $0x90] sm:$0xff]
    %v1664 = vld [vmem:[%s1638 + $0x98] sm:$0xf]
    %v1665 = vld [vmem:[%s1638 + $0x9c] sm:$0xff]
    %v1666 = vld [vmem:[%s1638 + $0xa4] sm:$0xf]
    %v1667 = vld [vmem:[%s1638 + $0xa8] sm:$0xff]
    %v1668 = vld [vmem:[%s1638 + $0xb0] sm:$0xf]
    %v1669 = vld [vmem:[%s1638 + $0xb4] sm:$0xff]
    %v1670 = vld [vmem:[%s1638 + $0xbc] sm:$0xf]
    %v1671 = vld [vmem:[%s1638 + $0xc0] sm:$0xff]
    %v1672 = vld [vmem:[%s1638 + $0xc8] sm:$0xf]
    %v1673 = vld [vmem:[%s1638 + $0xcc] sm:$0xff]
    %v1674 = vld [vmem:[%s1638 + $0xd4] sm:$0xf]
    %v1675 = vld [vmem:[%s1638 + $0xd8] sm:$0xff]
    %v1676 = vld [vmem:[%s1638 + $0xe0] sm:$0xf]
    %v1677 = vld [vmem:[%s1638 + $0xe4] sm:$0xff]
    %v1678 = vld [vmem:[%s1638 + $0xec] sm:$0xf]
    %v1679 = vld [vmem:[%s1638 + $0xf0] sm:$0xff]
    %v1680 = vld [vmem:[%s1638 + $0xf8] sm:$0xf]
    %v1681 = vld [vmem:[%s1638 + $0xfc] sm:$0xff]
    %v1682 = vld [vmem:[%s1638 + $0x104] sm:$0xf]
    %v1683 = vld [vmem:[%s1638 + $0x108] sm:$0xff]
    %v1684 = vld [vmem:[%s1638 + $0x110] sm:$0xf]
    %v1685 = vld [vmem:[%s1638 + $0x114] sm:$0xff]
    %v1686 = vld [vmem:[%s1638 + $0x11c] sm:$0xf]
    %v1687 = vld [vmem:[%s1638 + $0x120] sm:$0xff]
    %v1688 = vld [vmem:[%s1638 + $0x128] sm:$0xf]
    %v1689 = vld [vmem:[%s1638 + $0x12c] sm:$0xff]
    %v1690 = vld [vmem:[%s1638 + $0x134] sm:$0xf]
    %v1691 = vld [vmem:[%s1638 + $0x138] sm:$0xff]
    %v1692 = vld [vmem:[%s1638 + $0x140] sm:$0xf]
    %v1693 = vld [vmem:[%s1638 + $0x144] sm:$0xff]
    %v1694 = vld [vmem:[%s1638 + $0x14c] sm:$0xf]
    %v1695 = vld [vmem:[%s1638 + $0x150] sm:$0xff]
    %v1696 = vld [vmem:[%s1638 + $0x158] sm:$0xf]
    %v1697 = vld [vmem:[%s1638 + $0x15c] sm:$0xff]
    %v1698 = vld [vmem:[%s1638 + $0x164] sm:$0xf]
    %v1699 = vld [vmem:[%s1638 + $0x168] sm:$0xff]
    %v1700 = vld [vmem:[%s1638 + $0x170] sm:$0xf]
    %v1701 = vld [vmem:[%s1638 + $0x174] sm:$0xff]
    %v1702 = vld [vmem:[%s1638 + $0x17c] sm:$0xf]
    %s1703 = scalar_lea.vmem [#allocation5], 384
    %v1704 = vld [vmem:[%s1703] sm:$0xf]
    %v1705 = vld [vmem:[%s1703 + $0x4] sm:$0xf]
    %v1706 = vld [vmem:[%s1703 + $0x8] sm:$0xf]
    %v1707 = vld [vmem:[%s1703 + $0xc] sm:$0xf]
    %v1708 = vld [vmem:[%s1703 + $0x10] sm:$0xf]
    %v1709 = vld [vmem:[%s1703 + $0x14] sm:$0xf]
    %v1710 = vld [vmem:[%s1703 + $0x18] sm:$0xf]
    %v1711 = vld [vmem:[%s1703 + $0x1c] sm:$0xf]
    %v1712 = vld [vmem:[%s1703 + $0x20] sm:$0xf]
    %v1713 = vld [vmem:[%s1703 + $0x24] sm:$0xf]
    %v1714 = vld [vmem:[%s1703 + $0x28] sm:$0xf]
    %v1715 = vld [vmem:[%s1703 + $0x2c] sm:$0xf]
    %v1716 = vld [vmem:[%s1703 + $0x30] sm:$0xf]
    %v1717 = vld [vmem:[%s1703 + $0x34] sm:$0xf]
    %v1718 = vld [vmem:[%s1703 + $0x38] sm:$0xf]
    %v1719 = vld [vmem:[%s1703 + $0x3c] sm:$0xf]
    %v1720 = vld [vmem:[%s1703 + $0x40] sm:$0xf]
    %v1721 = vld [vmem:[%s1703 + $0x44] sm:$0xf]
    %v1722 = vld [vmem:[%s1703 + $0x48] sm:$0xf]
    %v1723 = vld [vmem:[%s1703 + $0x4c] sm:$0xf]
    %v1724 = vld [vmem:[%s1703 + $0x50] sm:$0xf]
    %v1725 = vld [vmem:[%s1703 + $0x54] sm:$0xf]
    %v1726 = vld [vmem:[%s1703 + $0x58] sm:$0xf]
    %v1727 = vld [vmem:[%s1703 + $0x5c] sm:$0xf]
    %v1728 = vld [vmem:[%s1703 + $0x60] sm:$0xf]
    %v1729 = vld [vmem:[%s1703 + $0x64] sm:$0xf]
    %v1730 = vld [vmem:[%s1703 + $0x68] sm:$0xf]
    %v1731 = vld [vmem:[%s1703 + $0x6c] sm:$0xf]
    %v1732 = vld [vmem:[%s1703 + $0x70] sm:$0xf]
    %v1733 = vld [vmem:[%s1703 + $0x74] sm:$0xf]
    %v1734 = vld [vmem:[%s1703 + $0x78] sm:$0xf]
    %v1735 = vld [vmem:[%s1703 + $0x7c] sm:$0xf]
    %v1736 = vld [vmem:[%s1703 + $0x80] sm:$0xf]
    %v1737 = vld [vmem:[%s1703 + $0x84] sm:$0xf]
    %v1738 = vld [vmem:[%s1703 + $0x88] sm:$0xf]
    %v1739 = vld [vmem:[%s1703 + $0x8c] sm:$0xf]
    %v1740 = vld [vmem:[%s1703 + $0x90] sm:$0xf]
    %v1741 = vld [vmem:[%s1703 + $0x94] sm:$0xf]
    %v1742 = vld [vmem:[%s1703 + $0x98] sm:$0xf]
    %v1743 = vld [vmem:[%s1703 + $0x9c] sm:$0xf]
    %v1744 = vld [vmem:[%s1703 + $0xa0] sm:$0xf]
    %v1745 = vld [vmem:[%s1703 + $0xa4] sm:$0xf]
    %v1746 = vld [vmem:[%s1703 + $0xa8] sm:$0xf]
    %v1747 = vld [vmem:[%s1703 + $0xac] sm:$0xf]
    %v1748 = vld [vmem:[%s1703 + $0xb0] sm:$0xf]
    %v1749 = vld [vmem:[%s1703 + $0xb4] sm:$0xf]
    %v1750 = vld [vmem:[%s1703 + $0xb8] sm:$0xf]
    %v1751 = vld [vmem:[%s1703 + $0xbc] sm:$0xf]
    %v1816 = vunpack.c.l.b16 %v1639
    %v1817 = vunpack.c.h.b16 %v1639
    %v1818 = vunpack.c.l.b16 %v1640
    %v1819 = vunpack.c.l.b16 %v1641
    %v1820 = vunpack.c.h.b16 %v1641
    %v1821 = vunpack.c.l.b16 %v1642
    %v1822 = vunpack.c.l.b16 %v1643
    %v1823 = vunpack.c.h.b16 %v1643
    %v1824 = vunpack.c.l.b16 %v1644
    %v1825 = vunpack.c.l.b16 %v1645
    %v1826 = vunpack.c.h.b16 %v1645
    %v1827 = vunpack.c.l.b16 %v1646
    %v1828 = vunpack.c.l.b16 %v1647
    %v1829 = vunpack.c.h.b16 %v1647
    %v1830 = vunpack.c.l.b16 %v1648
    %v1831 = vunpack.c.l.b16 %v1649
    %v1832 = vunpack.c.h.b16 %v1649
    %v1833 = vunpack.c.l.b16 %v1650
    %v1834 = vunpack.c.l.b16 %v1651
    %v1835 = vunpack.c.h.b16 %v1651
    %v1836 = vunpack.c.l.b16 %v1652
    %v1837 = vunpack.c.l.b16 %v1653
    %v1838 = vunpack.c.h.b16 %v1653
    %v1839 = vunpack.c.l.b16 %v1654
    %v1840 = vunpack.c.l.b16 %v1655
    %v1841 = vunpack.c.h.b16 %v1655
    %v1842 = vunpack.c.l.b16 %v1656
    %v1843 = vunpack.c.l.b16 %v1657
    %v1844 = vunpack.c.h.b16 %v1657
    %v1845 = vunpack.c.l.b16 %v1658
    %v1846 = vunpack.c.l.b16 %v1659
    %v1847 = vunpack.c.h.b16 %v1659
    %v1848 = vunpack.c.l.b16 %v1660
    %v1849 = vunpack.c.l.b16 %v1661
    %v1850 = vunpack.c.h.b16 %v1661
    %v1851 = vunpack.c.l.b16 %v1662
    %v1852 = vunpack.c.l.b16 %v1663
    %v1853 = vunpack.c.h.b16 %v1663
    %v1854 = vunpack.c.l.b16 %v1664
    %v1855 = vunpack.c.l.b16 %v1665
    %v1856 = vunpack.c.h.b16 %v1665
    %v1857 = vunpack.c.l.b16 %v1666
    %v1858 = vunpack.c.l.b16 %v1667
    %v1859 = vunpack.c.h.b16 %v1667
    %v1860 = vunpack.c.l.b16 %v1668
    %v1861 = vunpack.c.l.b16 %v1669
    %v1862 = vunpack.c.h.b16 %v1669
    %v1863 = vunpack.c.l.b16 %v1670
    %v1864 = vunpack.c.l.b16 %v1671
    %v1865 = vunpack.c.h.b16 %v1671
    %v1866 = vunpack.c.l.b16 %v1672
    %v1867 = vunpack.c.l.b16 %v1673
    %v1868 = vunpack.c.h.b16 %v1673
    %v1869 = vunpack.c.l.b16 %v1674
    %v1870 = vunpack.c.l.b16 %v1675
    %v1871 = vunpack.c.h.b16 %v1675
    %v1872 = vunpack.c.l.b16 %v1676
    %v1873 = vunpack.c.l.b16 %v1677
    %v1874 = vunpack.c.h.b16 %v1677
    %v1875 = vunpack.c.l.b16 %v1678
    %v1876 = vunpack.c.l.b16 %v1679
    %v1877 = vunpack.c.h.b16 %v1679
    %v1878 = vunpack.c.l.b16 %v1680
    %v1879 = vunpack.c.l.b16 %v1681
    %v1880 = vunpack.c.h.b16 %v1681
    %v1881 = vunpack.c.l.b16 %v1682
    %v1882 = vunpack.c.l.b16 %v1683
    %v1883 = vunpack.c.h.b16 %v1683
    %v1884 = vunpack.c.l.b16 %v1684
    %v1885 = vunpack.c.l.b16 %v1685
    %v1886 = vunpack.c.h.b16 %v1685
    %v1887 = vunpack.c.l.b16 %v1686
    %v1888 = vunpack.c.l.b16 %v1687
    %v1889 = vunpack.c.h.b16 %v1687
    %v1890 = vunpack.c.l.b16 %v1688
    %v1891 = vunpack.c.l.b16 %v1689
    %v1892 = vunpack.c.h.b16 %v1689
    %v1893 = vunpack.c.l.b16 %v1690
    %v1894 = vunpack.c.l.b16 %v1691
    %v1895 = vunpack.c.h.b16 %v1691
    %v1896 = vunpack.c.l.b16 %v1692
    %v1897 = vunpack.c.l.b16 %v1693
    %v1898 = vunpack.c.h.b16 %v1693
    %v1899 = vunpack.c.l.b16 %v1694
    %v1900 = vunpack.c.l.b16 %v1695
    %v1901 = vunpack.c.h.b16 %v1695
    %v1902 = vunpack.c.l.b16 %v1696
    %v1903 = vunpack.c.l.b16 %v1697
    %v1904 = vunpack.c.h.b16 %v1697
    %v1905 = vunpack.c.l.b16 %v1698
    %v1906 = vunpack.c.l.b16 %v1699
    %v1907 = vunpack.c.h.b16 %v1699
    %v1908 = vunpack.c.l.b16 %v1700
    %v1909 = vunpack.c.l.b16 %v1701
    %v1910 = vunpack.c.h.b16 %v1701
    %v1911 = vunpack.c.l.b16 %v1702
    %v1912 = vpack.c.b16 %v1819, %v1816
    %v1913 = vpack.c.b16 %v1820, %v1817
    %v1914 = vpack.c.b16 %v1821, %v1818
    %v1915 = vpack.c.b16 %v1825, %v1822
    %v1916 = vpack.c.b16 %v1826, %v1823
    %v1917 = vpack.c.b16 %v1827, %v1824
    %v1918 = vpack.c.b16 %v1831, %v1828
    %v1919 = vpack.c.b16 %v1832, %v1829
    %v1920 = vpack.c.b16 %v1833, %v1830
    %v1921 = vpack.c.b16 %v1837, %v1834
    %v1922 = vpack.c.b16 %v1838, %v1835
    %v1923 = vpack.c.b16 %v1839, %v1836
    %v1924 = vpack.c.b16 %v1843, %v1840
    %v1925 = vpack.c.b16 %v1844, %v1841
    %v1926 = vpack.c.b16 %v1845, %v1842
    %v1927 = vpack.c.b16 %v1849, %v1846
    %v1928 = vpack.c.b16 %v1850, %v1847
    %v1929 = vpack.c.b16 %v1851, %v1848
    %v1930 = vpack.c.b16 %v1855, %v1852
    %v1931 = vpack.c.b16 %v1856, %v1853
    %v1932 = vpack.c.b16 %v1857, %v1854
    %v1933 = vpack.c.b16 %v1861, %v1858
    %v1934 = vpack.c.b16 %v1862, %v1859
    %v1935 = vpack.c.b16 %v1863, %v1860
    %v1936 = vpack.c.b16 %v1867, %v1864
    %v1937 = vpack.c.b16 %v1868, %v1865
    %v1938 = vpack.c.b16 %v1869, %v1866
    %v1939 = vpack.c.b16 %v1873, %v1870
    %v1940 = vpack.c.b16 %v1874, %v1871
    %v1941 = vpack.c.b16 %v1875, %v1872
    %v1942 = vpack.c.b16 %v1879, %v1876
    %v1943 = vpack.c.b16 %v1880, %v1877
    %v1944 = vpack.c.b16 %v1881, %v1878
    %v1945 = vpack.c.b16 %v1885, %v1882
    %v1946 = vpack.c.b16 %v1886, %v1883
    %v1947 = vpack.c.b16 %v1887, %v1884
    %v1948 = vpack.c.b16 %v1891, %v1888
    %v1949 = vpack.c.b16 %v1892, %v1889
    %v1950 = vpack.c.b16 %v1893, %v1890
    %v1951 = vpack.c.b16 %v1897, %v1894
    %v1952 = vpack.c.b16 %v1898, %v1895
    %v1953 = vpack.c.b16 %v1899, %v1896
    %v1954 = vpack.c.b16 %v1903, %v1900
    %v1955 = vpack.c.b16 %v1904, %v1901
    %v1956 = vpack.c.b16 %v1905, %v1902
    %v1957 = vpack.c.b16 %v1909, %v1906
    %v1958 = vpack.c.b16 %v1910, %v1907
    %v1959 = vpack.c.b16 %v1911, %v1908
    %v2056 = vunpack.c.l.b16 %v1704
    %v2057 = vunpack.c.l.b16 %v1705
    %v2058 = vunpack.c.l.b16 %v1706
    %v2059 = vunpack.c.l.b16 %v1707
    %v2060 = vunpack.c.l.b16 %v1708
    %v2061 = vunpack.c.l.b16 %v1709
    %v2062 = vunpack.c.l.b16 %v1710
    %v2063 = vunpack.c.l.b16 %v1711
    %v2064 = vunpack.c.l.b16 %v1712
    %v2065 = vunpack.c.l.b16 %v1713
    %v2066 = vunpack.c.l.b16 %v1714
    %v2067 = vunpack.c.l.b16 %v1715
    %v2068 = vunpack.c.l.b16 %v1716
    %v2069 = vunpack.c.l.b16 %v1717
    %v2070 = vunpack.c.l.b16 %v1718
    %v2071 = vunpack.c.l.b16 %v1719
    %v2072 = vunpack.c.l.b16 %v1720
    %v2073 = vunpack.c.l.b16 %v1721
    %v2074 = vunpack.c.l.b16 %v1722
    %v2075 = vunpack.c.l.b16 %v1723
    %v2076 = vunpack.c.l.b16 %v1724
    %v2077 = vunpack.c.l.b16 %v1725
    %v2078 = vunpack.c.l.b16 %v1726
    %v2079 = vunpack.c.l.b16 %v1727
    %v2080 = vunpack.c.l.b16 %v1728
    %v2081 = vunpack.c.l.b16 %v1729
    %v2082 = vunpack.c.l.b16 %v1730
    %v2083 = vunpack.c.l.b16 %v1731
    %v2084 = vunpack.c.l.b16 %v1732
    %v2085 = vunpack.c.l.b16 %v1733
    %v2086 = vunpack.c.l.b16 %v1734
    %v2087 = vunpack.c.l.b16 %v1735
    %v2088 = vunpack.c.l.b16 %v1736
    %v2089 = vunpack.c.l.b16 %v1737
    %v2090 = vunpack.c.l.b16 %v1738
    %v2091 = vunpack.c.l.b16 %v1739
    %v2092 = vunpack.c.l.b16 %v1740
    %v2093 = vunpack.c.l.b16 %v1741
    %v2094 = vunpack.c.l.b16 %v1742
    %v2095 = vunpack.c.l.b16 %v1743
    %v2096 = vunpack.c.l.b16 %v1744
    %v2097 = vunpack.c.l.b16 %v1745
    %v2098 = vunpack.c.l.b16 %v1746
    %v2099 = vunpack.c.l.b16 %v1747
    %v2100 = vunpack.c.l.b16 %v1748
    %v2101 = vunpack.c.l.b16 %v1749
    %v2102 = vunpack.c.l.b16 %v1750
    %v2103 = vunpack.c.l.b16 %v1751
    %v2104 = vpack.c.b16 %v2057, %v2056
    %v2105 = vpack.c.b16 %v2059, %v2058
    %v2106 = vpack.c.b16 %v2061, %v2060
    %v2107 = vpack.c.b16 %v2063, %v2062
    %v2108 = vpack.c.b16 %v2065, %v2064
    %v2109 = vpack.c.b16 %v2067, %v2066
    %v2110 = vpack.c.b16 %v2069, %v2068
    %v2111 = vpack.c.b16 %v2071, %v2070
    %v2112 = vpack.c.b16 %v2073, %v2072
    %v2113 = vpack.c.b16 %v2075, %v2074
    %v2114 = vpack.c.b16 %v2077, %v2076
    %v2115 = vpack.c.b16 %v2079, %v2078
    %v2116 = vpack.c.b16 %v2081, %v2080
    %v2117 = vpack.c.b16 %v2083, %v2082
    %v2118 = vpack.c.b16 %v2085, %v2084
    %v2119 = vpack.c.b16 %v2087, %v2086
    %v2120 = vpack.c.b16 %v2089, %v2088
    %v2121 = vpack.c.b16 %v2091, %v2090
    %v2122 = vpack.c.b16 %v2093, %v2092
    %v2123 = vpack.c.b16 %v2095, %v2094
    %v2124 = vpack.c.b16 %v2097, %v2096
    %v2125 = vpack.c.b16 %v2099, %v2098
    %v2126 = vpack.c.b16 %v2101, %v2100
    %v2127 = vpack.c.b16 %v2103, %v2102
    %2152 = vmatpush.bf16.msra.mxu0 %v2111
    %2153 = vmatpush.bf16.msra.mxu0 %v2110
    %2154 = vmatpush.bf16.msra.mxu0 %v2109
    %2155 = vmatpush.bf16.msra.mxu0 %v2108
    %2156 = vmatpush.bf16.msra.mxu0 %v2107
    %2157 = vmatpush.bf16.msra.mxu0 %v2106
    %2158 = vmatpush.bf16.msra.mxu0 %v2105
    %2159 = vmatpush.bf16.msra.mxu0 %v2104
    %2160 = vmatmul.bf16.gmra.mxu0 %v1912
    %v2161 = vpop.f32.mrf.mxu0
    %v2162 = vadd.f32 0.0, %v2161
    %v2163 = vpop.f32.mrf.mxu0
    %v2164 = vadd.f32 0.0, %v2163
    %2165 = vmatmul.bf16.gmra.mxu0 %v1915
    %v2166 = vpop.f32.mrf.mxu0
    %v2167 = vadd.f32 0.0, %v2166
    %v2168 = vpop.f32.mrf.mxu0
    %v2169 = vadd.f32 0.0, %v2168
    %2170 = vmatmul.bf16.gmra.mxu0 %v1918
    %v2171 = vpop.f32.mrf.mxu0
    %v2172 = vadd.f32 0.0, %v2171
    %v2173 = vpop.f32.mrf.mxu0
    %v2174 = vadd.f32 0.0, %v2173
    %2175 = vmatmul.bf16.gmra.mxu0 %v1921
    %v2176 = vpop.f32.mrf.mxu0
    %v2177 = vadd.f32 0.0, %v2176
    %v2178 = vpop.f32.mrf.mxu0
    %v2179 = vadd.f32 0.0, %v2178
    %2180 = vmatmul.bf16.gmra.mxu0 %v1924
    %v2181 = vpop.f32.mrf.mxu0
    %v2182 = vadd.f32 0.0, %v2181
    %v2183 = vpop.f32.mrf.mxu0
    %v2184 = vadd.f32 0.0, %v2183
    %2185 = vmatmul.bf16.gmra.mxu0 %v1927
    %v2186 = vpop.f32.mrf.mxu0
    %v2187 = vadd.f32 0.0, %v2186
    %v2188 = vpop.f32.mrf.mxu0
    %v2189 = vadd.f32 0.0, %v2188
    %2190 = vmatmul.bf16.gmra.mxu0 %v1930
    %v2191 = vpop.f32.mrf.mxu0
    %v2192 = vadd.f32 0.0, %v2191
    %v2193 = vpop.f32.mrf.mxu0
    %v2194 = vadd.f32 0.0, %v2193
    %2195 = vmatmul.bf16.gmra.mxu0 %v1933
    %v2196 = vpop.f32.mrf.mxu0
    %v2197 = vadd.f32 0.0, %v2196
    %v2198 = vpop.f32.mrf.mxu0
    %v2199 = vadd.f32 0.0, %v2198
    %2200 = vmatmul.bf16.gmra.mxu0 %v1936
    %v2201 = vpop.f32.mrf.mxu0
    %v2202 = vadd.f32 0.0, %v2201
    %v2203 = vpop.f32.mrf.mxu0
    %v2204 = vadd.f32 0.0, %v2203
    %2205 = vmatmul.bf16.gmra.mxu0 %v1939
    %v2206 = vpop.f32.mrf.mxu0
    %v2207 = vadd.f32 0.0, %v2206
    %v2208 = vpop.f32.mrf.mxu0
    %v2209 = vadd.f32 0.0, %v2208
    %2210 = vmatmul.bf16.gmra.mxu0 %v1942
    %v2211 = vpop.f32.mrf.mxu0
    %v2212 = vadd.f32 0.0, %v2211
    %v2213 = vpop.f32.mrf.mxu0
    %v2214 = vadd.f32 0.0, %v2213
    %2215 = vmatmul.bf16.gmra.mxu0 %v1945
    %v2216 = vpop.f32.mrf.mxu0
    %v2217 = vadd.f32 0.0, %v2216
    %v2218 = vpop.f32.mrf.mxu0
    %v2219 = vadd.f32 0.0, %v2218
    %2220 = vmatmul.bf16.gmra.mxu0 %v1948
    %v2221 = vpop.f32.mrf.mxu0
    %v2222 = vadd.f32 0.0, %v2221
    %v2223 = vpop.f32.mrf.mxu0
    %v2224 = vadd.f32 0.0, %v2223
    %2225 = vmatmul.bf16.gmra.mxu0 %v1951
    %v2226 = vpop.f32.mrf.mxu0
    %v2227 = vadd.f32 0.0, %v2226
    %v2228 = vpop.f32.mrf.mxu0
    %v2229 = vadd.f32 0.0, %v2228
    %2230 = vmatmul.bf16.gmra.mxu0 %v1954
    %v2231 = vpop.f32.mrf.mxu0
    %v2232 = vadd.f32 0.0, %v2231
    %v2233 = vpop.f32.mrf.mxu0
    %v2234 = vadd.f32 0.0, %v2233
    %2235 = vmatmul.bf16.gmra.mxu0 %v1957
    %v2236 = vpop.f32.mrf.mxu0
    %v2237 = vadd.f32 0.0, %v2236
    %v2238 = vpop.f32.mrf.mxu0
    %v2239 = vadd.f32 0.0, %v2238
    %2240 = vdwg.mxu0
    %2241 = vmatpush.bf16.msra.mxu0 %v2119
    %2242 = vmatpush.bf16.msra.mxu0 %v2118
    %2243 = vmatpush.bf16.msra.mxu0 %v2117
    %2244 = vmatpush.bf16.msra.mxu0 %v2116
    %2245 = vmatpush.bf16.msra.mxu0 %v2115
    %2246 = vmatpush.bf16.msra.mxu0 %v2114
    %2247 = vmatpush.bf16.msra.mxu0 %v2113
    %2248 = vmatpush.bf16.msra.mxu0 %v2112
    %2249 = vmatmul.bf16.gmra.mxu0 %v1913
    %v2250 = vpop.f32.mrf.mxu0
    %v2251 = vadd.f32 %v2162, %v2250
    %v2252 = vpop.f32.mrf.mxu0
    %v2253 = vadd.f32 %v2164, %v2252
    %2254 = vmatmul.bf16.gmra.mxu0 %v1916
    %v2255 = vpop.f32.mrf.mxu0
    %v2256 = vadd.f32 %v2167, %v2255
    %v2257 = vpop.f32.mrf.mxu0
    %v2258 = vadd.f32 %v2169, %v2257
    %2259 = vmatmul.bf16.gmra.mxu0 %v1919
    %v2260 = vpop.f32.mrf.mxu0
    %v2261 = vadd.f32 %v2172, %v2260
    %v2262 = vpop.f32.mrf.mxu0
    %v2263 = vadd.f32 %v2174, %v2262
    %2264 = vmatmul.bf16.gmra.mxu0 %v1922
    %v2265 = vpop.f32.mrf.mxu0
    %v2266 = vadd.f32 %v2177, %v2265
    %v2267 = vpop.f32.mrf.mxu0
    %v2268 = vadd.f32 %v2179, %v2267
    %2269 = vmatmul.bf16.gmra.mxu0 %v1925
    %v2270 = vpop.f32.mrf.mxu0
    %v2271 = vadd.f32 %v2182, %v2270
    %v2272 = vpop.f32.mrf.mxu0
    %v2273 = vadd.f32 %v2184, %v2272
    %2274 = vmatmul.bf16.gmra.mxu0 %v1928
    %v2275 = vpop.f32.mrf.mxu0
    %v2276 = vadd.f32 %v2187, %v2275
    %v2277 = vpop.f32.mrf.mxu0
    %v2278 = vadd.f32 %v2189, %v2277
    %2279 = vmatmul.bf16.gmra.mxu0 %v1931
    %v2280 = vpop.f32.mrf.mxu0
    %v2281 = vadd.f32 %v2192, %v2280
    %v2282 = vpop.f32.mrf.mxu0
    %v2283 = vadd.f32 %v2194, %v2282
    %2284 = vmatmul.bf16.gmra.mxu0 %v1934
    %v2285 = vpop.f32.mrf.mxu0
    %v2286 = vadd.f32 %v2197, %v2285
    %v2287 = vpop.f32.mrf.mxu0
    %v2288 = vadd.f32 %v2199, %v2287
    %2289 = vmatmul.bf16.gmra.mxu0 %v1937
    %v2290 = vpop.f32.mrf.mxu0
    %v2291 = vadd.f32 %v2202, %v2290
    %v2292 = vpop.f32.mrf.mxu0
    %v2293 = vadd.f32 %v2204, %v2292
    %2294 = vmatmul.bf16.gmra.mxu0 %v1940
    %v2295 = vpop.f32.mrf.mxu0
    %v2296 = vadd.f32 %v2207, %v2295
    %v2297 = vpop.f32.mrf.mxu0
    %v2298 = vadd.f32 %v2209, %v2297
    %2299 = vmatmul.bf16.gmra.mxu0 %v1943
    %v2300 = vpop.f32.mrf.mxu0
    %v2301 = vadd.f32 %v2212, %v2300
    %v2302 = vpop.f32.mrf.mxu0
    %v2303 = vadd.f32 %v2214, %v2302
    %2304 = vmatmul.bf16.gmra.mxu0 %v1946
    %v2305 = vpop.f32.mrf.mxu0
    %v2306 = vadd.f32 %v2217, %v2305
    %v2307 = vpop.f32.mrf.mxu0
    %v2308 = vadd.f32 %v2219, %v2307
    %2309 = vmatmul.bf16.gmra.mxu0 %v1949
    %v2310 = vpop.f32.mrf.mxu0
    %v2311 = vadd.f32 %v2222, %v2310
    %v2312 = vpop.f32.mrf.mxu0
    %v2313 = vadd.f32 %v2224, %v2312
    %2314 = vmatmul.bf16.gmra.mxu0 %v1952
    %v2315 = vpop.f32.mrf.mxu0
    %v2316 = vadd.f32 %v2227, %v2315
    %v2317 = vpop.f32.mrf.mxu0
    %v2318 = vadd.f32 %v2229, %v2317
    %2319 = vmatmul.bf16.gmra.mxu0 %v1955
    %v2320 = vpop.f32.mrf.mxu0
    %v2321 = vadd.f32 %v2232, %v2320
    %v2322 = vpop.f32.mrf.mxu0
    %v2323 = vadd.f32 %v2234, %v2322
    %2324 = vmatmul.bf16.gmra.mxu0 %v1958
    %v2325 = vpop.f32.mrf.mxu0
    %v2326 = vadd.f32 %v2237, %v2325
    %v2327 = vpop.f32.mrf.mxu0
    %v2328 = vadd.f32 %v2239, %v2327
    %2329 = vdwg.mxu0
    %2330 = vmatpush.bf16.msra.mxu0 %v2127
    %2331 = vmatpush.bf16.msra.mxu0 %v2126
    %2332 = vmatpush.bf16.msra.mxu0 %v2125
    %2333 = vmatpush.bf16.msra.mxu0 %v2124
    %2334 = vmatpush.bf16.msra.mxu0 %v2123
    %2335 = vmatpush.bf16.msra.mxu0 %v2122
    %2336 = vmatpush.bf16.msra.mxu0 %v2121
    %2337 = vmatpush.bf16.msra.mxu0 %v2120
    %2338 = vmatmul.bf16.gmra.mxu0 %v1914
    %v2339 = vpop.f32.mrf.mxu0
    %v2340 = vadd.f32 %v2251, %v2339
    %v2341 = vpop.f32.mrf.mxu0
    %v2342 = vadd.f32 %v2253, %v2341
    %2343 = vmatmul.bf16.gmra.mxu0 %v1917
    %v2344 = vpop.f32.mrf.mxu0
    %v2345 = vadd.f32 %v2256, %v2344
    %v2346 = vpop.f32.mrf.mxu0
    %v2347 = vadd.f32 %v2258, %v2346
    %2348 = vmatmul.bf16.gmra.mxu0 %v1920
    %v2349 = vpop.f32.mrf.mxu0
    %v2350 = vadd.f32 %v2261, %v2349
    %v2351 = vpop.f32.mrf.mxu0
    %v2352 = vadd.f32 %v2263, %v2351
    %2353 = vmatmul.bf16.gmra.mxu0 %v1923
    %v2354 = vpop.f32.mrf.mxu0
    %v2355 = vadd.f32 %v2266, %v2354
    %v2356 = vpop.f32.mrf.mxu0
    %v2357 = vadd.f32 %v2268, %v2356
    %2358 = vmatmul.bf16.gmra.mxu0 %v1926
    %v2359 = vpop.f32.mrf.mxu0
    %v2360 = vadd.f32 %v2271, %v2359
    %v2361 = vpop.f32.mrf.mxu0
    %v2362 = vadd.f32 %v2273, %v2361
    %2363 = vmatmul.bf16.gmra.mxu0 %v1929
    %v2364 = vpop.f32.mrf.mxu0
    %v2365 = vadd.f32 %v2276, %v2364
    %v2366 = vpop.f32.mrf.mxu0
    %v2367 = vadd.f32 %v2278, %v2366
    %2368 = vmatmul.bf16.gmra.mxu0 %v1932
    %v2369 = vpop.f32.mrf.mxu0
    %v2370 = vadd.f32 %v2281, %v2369
    %v2371 = vpop.f32.mrf.mxu0
    %v2372 = vadd.f32 %v2283, %v2371
    %2373 = vmatmul.bf16.gmra.mxu0 %v1935
    %v2374 = vpop.f32.mrf.mxu0
    %v2375 = vadd.f32 %v2286, %v2374
    %v2376 = vpop.f32.mrf.mxu0
    %v2377 = vadd.f32 %v2288, %v2376
    %2378 = vmatmul.bf16.gmra.mxu0 %v1938
    %v2379 = vpop.f32.mrf.mxu0
    %v2380 = vadd.f32 %v2291, %v2379
    %v2381 = vpop.f32.mrf.mxu0
    %v2382 = vadd.f32 %v2293, %v2381
    %2383 = vmatmul.bf16.gmra.mxu0 %v1941
    %v2384 = vpop.f32.mrf.mxu0
    %v2385 = vadd.f32 %v2296, %v2384
    %v2386 = vpop.f32.mrf.mxu0
    %v2387 = vadd.f32 %v2298, %v2386
    %2388 = vmatmul.bf16.gmra.mxu0 %v1944
    %v2389 = vpop.f32.mrf.mxu0
    %v2390 = vadd.f32 %v2301, %v2389
    %v2391 = vpop.f32.mrf.mxu0
    %v2392 = vadd.f32 %v2303, %v2391
    %2393 = vmatmul.bf16.gmra.mxu0 %v1947
    %v2394 = vpop.f32.mrf.mxu0
    %v2395 = vadd.f32 %v2306, %v2394
    %v2396 = vpop.f32.mrf.mxu0
    %v2397 = vadd.f32 %v2308, %v2396
    %2398 = vmatmul.bf16.gmra.mxu0 %v1950
    %v2399 = vpop.f32.mrf.mxu0
    %v2400 = vadd.f32 %v2311, %v2399
    %v2401 = vpop.f32.mrf.mxu0
    %v2402 = vadd.f32 %v2313, %v2401
    %2403 = vmatmul.bf16.gmra.mxu0 %v1953
    %v2404 = vpop.f32.mrf.mxu0
    %v2405 = vadd.f32 %v2316, %v2404
    %v2406 = vpop.f32.mrf.mxu0
    %v2407 = vadd.f32 %v2318, %v2406
    %2408 = vmatmul.bf16.gmra.mxu0 %v1956
    %v2409 = vpop.f32.mrf.mxu0
    %v2410 = vadd.f32 %v2321, %v2409
    %v2411 = vpop.f32.mrf.mxu0
    %v2412 = vadd.f32 %v2323, %v2411
    %2413 = vmatmul.bf16.gmra.mxu0 %v1959
    %v2414 = vpop.f32.mrf.mxu0
    %v2415 = vadd.f32 %v2326, %v2414
    %v2416 = vpop.f32.mrf.mxu0
    %v2417 = vadd.f32 %v2328, %v2416
    %2418 = vdwg.mxu0
    %v2419 = vadd.f32 %v1556, %v2340
    %v2420 = vadd.f32 %v1558, %v2342
    %v2421 = vadd.f32 %v1561, %v2345
    %v2422 = vadd.f32 %v1563, %v2347
    %v2423 = vadd.f32 %v1566, %v2350
    %v2424 = vadd.f32 %v1568, %v2352
    %v2425 = vadd.f32 %v1571, %v2355
    %v2426 = vadd.f32 %v1573, %v2357
    %v2427 = vadd.f32 %v1576, %v2360
    %v2428 = vadd.f32 %v1578, %v2362
    %v2429 = vadd.f32 %v1581, %v2365
    %v2430 = vadd.f32 %v1583, %v2367
    %v2431 = vadd.f32 %v1586, %v2370
    %v2432 = vadd.f32 %v1588, %v2372
    %v2433 = vadd.f32 %v1591, %v2375
    %v2434 = vadd.f32 %v1593, %v2377
    %v2435 = vadd.f32 %v1596, %v2380
    %v2436 = vadd.f32 %v1598, %v2382
    %v2437 = vadd.f32 %v1601, %v2385
    %v2438 = vadd.f32 %v1603, %v2387
    %v2439 = vadd.f32 %v1606, %v2390
    %v2440 = vadd.f32 %v1608, %v2392
    %v2441 = vadd.f32 %v1611, %v2395
    %v2442 = vadd.f32 %v1613, %v2397
    %v2443 = vadd.f32 %v1616, %v2400
    %v2444 = vadd.f32 %v1618, %v2402
    %v2445 = vadd.f32 %v1621, %v2405
    %v2446 = vadd.f32 %v1623, %v2407
    %v2447 = vadd.f32 %v1626, %v2410
    %v2448 = vadd.f32 %v1628, %v2412
    %v2449 = vadd.f32 %v1631, %v2415
    %v2450 = vadd.f32 %v1633, %v2417
    %v2451 = vld [vmem:[%s2] sm:$0x1]
    %v2453 = vperm.slane %v2451, 0
    %v2455 = vadd.f32 %v2419, %v2453
    %v2456 = vadd.f32 %v2420, %v2453
    %v2457 = vadd.f32 %v2421, %v2453
    %v2458 = vadd.f32 %v2422, %v2453
    %v2459 = vadd.f32 %v2423, %v2453
    %v2460 = vadd.f32 %v2424, %v2453
    %v2461 = vadd.f32 %v2425, %v2453
    %v2462 = vadd.f32 %v2426, %v2453
    %v2463 = vadd.f32 %v2427, %v2453
    %v2464 = vadd.f32 %v2428, %v2453
    %v2465 = vadd.f32 %v2429, %v2453
    %v2466 = vadd.f32 %v2430, %v2453
    %v2467 = vadd.f32 %v2431, %v2453
    %v2468 = vadd.f32 %v2432, %v2453
    %v2469 = vadd.f32 %v2433, %v2453
    %v2470 = vadd.f32 %v2434, %v2453
    %v2471 = vadd.f32 %v2435, %v2453
    %v2472 = vadd.f32 %v2436, %v2453
    %v2473 = vadd.f32 %v2437, %v2453
    %v2474 = vadd.f32 %v2438, %v2453
    %v2475 = vadd.f32 %v2439, %v2453
    %v2476 = vadd.f32 %v2440, %v2453
    %v2477 = vadd.f32 %v2441, %v2453
    %v2478 = vadd.f32 %v2442, %v2453
    %v2479 = vadd.f32 %v2443, %v2453
    %v2480 = vadd.f32 %v2444, %v2453
    %v2481 = vadd.f32 %v2445, %v2453
    %v2482 = vadd.f32 %v2446, %v2453
    %v2483 = vadd.f32 %v2447, %v2453
    %v2484 = vadd.f32 %v2448, %v2453
    %v2485 = vadd.f32 %v2449, %v2453
    %v2486 = vadd.f32 %v2450, %v2453
    %v2487 = vmax.f32 %v2455, 0.0
    %v2488 = vmax.f32 %v2456, 0.0
    %v2489 = vmax.f32 %v2457, 0.0
    %v2490 = vmax.f32 %v2458, 0.0
    %v2491 = vmax.f32 %v2459, 0.0
    %v2492 = vmax.f32 %v2460, 0.0
    %v2493 = vmax.f32 %v2461, 0.0
    %v2494 = vmax.f32 %v2462, 0.0
    %v2495 = vmax.f32 %v2463, 0.0
    %v2496 = vmax.f32 %v2464, 0.0
    %v2497 = vmax.f32 %v2465, 0.0
    %v2498 = vmax.f32 %v2466, 0.0
    %v2499 = vmax.f32 %v2467, 0.0
    %v2500 = vmax.f32 %v2468, 0.0
    %v2501 = vmax.f32 %v2469, 0.0
    %v2502 = vmax.f32 %v2470, 0.0
    %v2503 = vmax.f32 %v2471, 0.0
    %v2504 = vmax.f32 %v2472, 0.0
    %v2505 = vmax.f32 %v2473, 0.0
    %v2506 = vmax.f32 %v2474, 0.0
    %v2507 = vmax.f32 %v2475, 0.0
    %v2508 = vmax.f32 %v2476, 0.0
    %v2509 = vmax.f32 %v2477, 0.0
    %v2510 = vmax.f32 %v2478, 0.0
    %v2511 = vmax.f32 %v2479, 0.0
    %v2512 = vmax.f32 %v2480, 0.0
    %v2513 = vmax.f32 %v2481, 0.0
    %v2514 = vmax.f32 %v2482, 0.0
    %v2515 = vmax.f32 %v2483, 0.0
    %v2516 = vmax.f32 %v2484, 0.0
    %v2517 = vmax.f32 %v2485, 0.0
    %v2518 = vmax.f32 %v2486, 0.0
    %v2519 = vpack.c.bf16 %v2488, %v2487
    %v2520 = vpack.c.bf16 %v2490, %v2489
    %v2521 = vpack.c.bf16 %v2492, %v2491
    %v2522 = vpack.c.bf16 %v2494, %v2493
    %v2523 = vpack.c.bf16 %v2496, %v2495
    %v2524 = vpack.c.bf16 %v2498, %v2497
    %v2525 = vpack.c.bf16 %v2500, %v2499
    %v2526 = vpack.c.bf16 %v2502, %v2501
    %v2527 = vpack.c.bf16 %v2504, %v2503
    %v2528 = vpack.c.bf16 %v2506, %v2505
    %v2529 = vpack.c.bf16 %v2508, %v2507
    %v2530 = vpack.c.bf16 %v2510, %v2509
    %v2531 = vpack.c.bf16 %v2512, %v2511
    %v2532 = vpack.c.bf16 %v2514, %v2513
    %v2533 = vpack.c.bf16 %v2516, %v2515
    %v2534 = vpack.c.bf16 %v2518, %v2517
    %v2535 = vld [vmem:[#allocation7] sm:$0xf]
    %v2536 = vld [vmem:[#allocation7 + $0x4] sm:$0xf]
    %v2537 = vld [vmem:[#allocation7 + $0x8] sm:$0xf]
    %v2538 = vld [vmem:[#allocation7 + $0xc] sm:$0xf]
    %v2539 = vld [vmem:[#allocation7 + $0x10] sm:$0xf]
    %v2540 = vld [vmem:[#allocation7 + $0x14] sm:$0xf]
    %v2541 = vld [vmem:[#allocation7 + $0x18] sm:$0xf]
    %v2542 = vld [vmem:[#allocation7 + $0x1c] sm:$0xf]
    %v2543 = vld [vmem:[#allocation7 + $0x20] sm:$0xf]
    %v2544 = vld [vmem:[#allocation7 + $0x24] sm:$0xf]
    %v2545 = vld [vmem:[#allocation7 + $0x28] sm:$0xf]
    %v2546 = vld [vmem:[#allocation7 + $0x2c] sm:$0xf]
    %v2547 = vld [vmem:[#allocation7 + $0x30] sm:$0xf]
    %v2548 = vld [vmem:[#allocation7 + $0x34] sm:$0xf]
    %v2549 = vld [vmem:[#allocation7 + $0x38] sm:$0xf]
    %v2550 = vld [vmem:[#allocation7 + $0x3c] sm:$0xf]
    %v2551 = vld [vmem:[%s4] sm:$0x1]
    %v2553 = vperm.slane %v2551, 0
    %v2571 = vunpack.c.l.b16 %v2535
    %v2572 = vunpack.c.l.b16 %v2536
    %v2573 = vunpack.c.l.b16 %v2537
    %v2574 = vunpack.c.l.b16 %v2538
    %v2575 = vunpack.c.l.b16 %v2539
    %v2576 = vunpack.c.l.b16 %v2540
    %v2577 = vunpack.c.l.b16 %v2541
    %v2578 = vunpack.c.l.b16 %v2542
    %v2579 = vunpack.c.l.b16 %v2543
    %v2580 = vunpack.c.l.b16 %v2544
    %v2581 = vunpack.c.l.b16 %v2545
    %v2582 = vunpack.c.l.b16 %v2546
    %v2583 = vunpack.c.l.b16 %v2547
    %v2584 = vunpack.c.l.b16 %v2548
    %v2585 = vunpack.c.l.b16 %v2549
    %v2586 = vunpack.c.l.b16 %v2550
    %v2587 = vpack.c.b16 %v2572, %v2571
    %v2588 = vpack.c.b16 %v2574, %v2573
    %v2589 = vpack.c.b16 %v2576, %v2575
    %v2590 = vpack.c.b16 %v2578, %v2577
    %v2591 = vpack.c.b16 %v2580, %v2579
    %v2592 = vpack.c.b16 %v2582, %v2581
    %v2593 = vpack.c.b16 %v2584, %v2583
    %v2594 = vpack.c.b16 %v2586, %v2585
    %2603 = vmatpush.bf16.msra.mxu0 %v2594
    %2604 = vmatpush.bf16.msra.mxu0 %v2593
    %2605 = vmatpush.bf16.msra.mxu0 %v2592
    %2606 = vmatpush.bf16.msra.mxu0 %v2591
    %2607 = vmatpush.bf16.msra.mxu0 %v2590
    %2608 = vmatpush.bf16.msra.mxu0 %v2589
    %2609 = vmatpush.bf16.msra.mxu0 %v2588
    %2610 = vmatpush.bf16.msra.mxu0 %v2587
    %2611 = vmatmul.bf16.gmra.mxu0 %v2519
    %v2612 = vpop.f32.mrf.mxu0
    %v2613 = vadd.f32 %v2553, %v2612
    %v2614 = vpop.f32.mrf.mxu0
    %v2615 = vadd.f32 %v2553, %v2614
    %2616 = vmatmul.bf16.gmra.mxu0 %v2520
    %v2617 = vpop.f32.mrf.mxu0
    %v2618 = vadd.f32 %v2553, %v2617
    %v2619 = vpop.f32.mrf.mxu0
    %v2620 = vadd.f32 %v2553, %v2619
    %2621 = vmatmul.bf16.gmra.mxu0 %v2521
    %v2622 = vpop.f32.mrf.mxu0
    %v2623 = vadd.f32 %v2553, %v2622
    %v2624 = vpop.f32.mrf.mxu0
    %v2625 = vadd.f32 %v2553, %v2624
    %2626 = vmatmul.bf16.gmra.mxu0 %v2522
    %v2627 = vpop.f32.mrf.mxu0
    %v2628 = vadd.f32 %v2553, %v2627
    %v2629 = vpop.f32.mrf.mxu0
    %v2630 = vadd.f32 %v2553, %v2629
    %2631 = vmatmul.bf16.gmra.mxu0 %v2523
    %v2632 = vpop.f32.mrf.mxu0
    %v2633 = vadd.f32 %v2553, %v2632
    %v2634 = vpop.f32.mrf.mxu0
    %v2635 = vadd.f32 %v2553, %v2634
    %2636 = vmatmul.bf16.gmra.mxu0 %v2524
    %v2637 = vpop.f32.mrf.mxu0
    %v2638 = vadd.f32 %v2553, %v2637
    %v2639 = vpop.f32.mrf.mxu0
    %v2640 = vadd.f32 %v2553, %v2639
    %2641 = vmatmul.bf16.gmra.mxu0 %v2525
    %v2642 = vpop.f32.mrf.mxu0
    %v2643 = vadd.f32 %v2553, %v2642
    %v2644 = vpop.f32.mrf.mxu0
    %v2645 = vadd.f32 %v2553, %v2644
    %2646 = vmatmul.bf16.gmra.mxu0 %v2526
    %v2647 = vpop.f32.mrf.mxu0
    %v2648 = vadd.f32 %v2553, %v2647
    %v2649 = vpop.f32.mrf.mxu0
    %v2650 = vadd.f32 %v2553, %v2649
    %2651 = vmatmul.bf16.gmra.mxu0 %v2527
    %v2652 = vpop.f32.mrf.mxu0
    %v2653 = vadd.f32 %v2553, %v2652
    %v2654 = vpop.f32.mrf.mxu0
    %v2655 = vadd.f32 %v2553, %v2654
    %2656 = vmatmul.bf16.gmra.mxu0 %v2528
    %v2657 = vpop.f32.mrf.mxu0
    %v2658 = vadd.f32 %v2553, %v2657
    %v2659 = vpop.f32.mrf.mxu0
    %v2660 = vadd.f32 %v2553, %v2659
    %2661 = vmatmul.bf16.gmra.mxu0 %v2529
    %v2662 = vpop.f32.mrf.mxu0
    %v2663 = vadd.f32 %v2553, %v2662
    %v2664 = vpop.f32.mrf.mxu0
    %v2665 = vadd.f32 %v2553, %v2664
    %2666 = vmatmul.bf16.gmra.mxu0 %v2530
    %v2667 = vpop.f32.mrf.mxu0
    %v2668 = vadd.f32 %v2553, %v2667
    %v2669 = vpop.f32.mrf.mxu0
    %v2670 = vadd.f32 %v2553, %v2669
    %2671 = vmatmul.bf16.gmra.mxu0 %v2531
    %v2672 = vpop.f32.mrf.mxu0
    %v2673 = vadd.f32 %v2553, %v2672
    %v2674 = vpop.f32.mrf.mxu0
    %v2675 = vadd.f32 %v2553, %v2674
    %2676 = vmatmul.bf16.gmra.mxu0 %v2532
    %v2677 = vpop.f32.mrf.mxu0
    %v2678 = vadd.f32 %v2553, %v2677
    %v2679 = vpop.f32.mrf.mxu0
    %v2680 = vadd.f32 %v2553, %v2679
    %2681 = vmatmul.bf16.gmra.mxu0 %v2533
    %v2682 = vpop.f32.mrf.mxu0
    %v2683 = vadd.f32 %v2553, %v2682
    %v2684 = vpop.f32.mrf.mxu0
    %v2685 = vadd.f32 %v2553, %v2684
    %2686 = vmatmul.bf16.gmra.mxu0 %v2534
    %v2687 = vpop.f32.mrf.mxu0
    %v2688 = vadd.f32 %v2553, %v2687
    %v2689 = vpop.f32.mrf.mxu0
    %v2690 = vadd.f32 %v2553, %v2689
    %2691 = vdwg.mxu0
    %2692 = vst [vmem:[#allocation8] sm:$0xff] %v2613
    %2693 = vst [vmem:[#allocation8 + $0x8] sm:$0xff] %v2615
    %2694 = vst [vmem:[#allocation8 + $0x10] sm:$0xff] %v2618
    %2695 = vst [vmem:[#allocation8 + $0x18] sm:$0xff] %v2620
    %2696 = vst [vmem:[#allocation8 + $0x20] sm:$0xff] %v2623
    %2697 = vst [vmem:[#allocation8 + $0x28] sm:$0xff] %v2625
    %2698 = vst [vmem:[#allocation8 + $0x30] sm:$0xff] %v2628
    %2699 = vst [vmem:[#allocation8 + $0x38] sm:$0xff] %v2630
    %2700 = vst [vmem:[#allocation8 + $0x40] sm:$0xff] %v2633
    %2701 = vst [vmem:[#allocation8 + $0x48] sm:$0xff] %v2635
    %2702 = vst [vmem:[#allocation8 + $0x50] sm:$0xff] %v2638
    %2703 = vst [vmem:[#allocation8 + $0x58] sm:$0xff] %v2640
    %2704 = vst [vmem:[#allocation8 + $0x60] sm:$0xff] %v2643
    %2705 = vst [vmem:[#allocation8 + $0x68] sm:$0xff] %v2645
    %2706 = vst [vmem:[#allocation8 + $0x70] sm:$0xff] %v2648
    %2707 = vst [vmem:[#allocation8 + $0x78] sm:$0xff] %v2650
    %2708 = vst [vmem:[#allocation8 + $0x80] sm:$0xff] %v2653
    %2709 = vst [vmem:[#allocation8 + $0x88] sm:$0xff] %v2655
    %2710 = vst [vmem:[#allocation8 + $0x90] sm:$0xff] %v2658
    %2711 = vst [vmem:[#allocation8 + $0x98] sm:$0xff] %v2660
    %2712 = vst [vmem:[#allocation8 + $0xa0] sm:$0xff] %v2663
    %2713 = vst [vmem:[#allocation8 + $0xa8] sm:$0xff] %v2665
    %2714 = vst [vmem:[#allocation8 + $0xb0] sm:$0xff] %v2668
    %2715 = vst [vmem:[#allocation8 + $0xb8] sm:$0xff] %v2670
    %2716 = vst [vmem:[#allocation8 + $0xc0] sm:$0xff] %v2673
    %2717 = vst [vmem:[#allocation8 + $0xc8] sm:$0xff] %v2675
    %2718 = vst [vmem:[#allocation8 + $0xd0] sm:$0xff] %v2678
    %2719 = vst [vmem:[#allocation8 + $0xd8] sm:$0xff] %v2680
    %2720 = vst [vmem:[#allocation8 + $0xe0] sm:$0xff] %v2683
    %2721 = vst [vmem:[#allocation8 + $0xe8] sm:$0xff] %v2685
    %2722 = vst [vmem:[#allocation8 + $0xf0] sm:$0xff] %v2688
    %2723 = vst [vmem:[#allocation8 + $0xf8] sm:$0xff] %v2690
    // Predicated region
    $region34: #{tpu_custom_call.1} parent=1 // pred_check
      _
    $region35: #{tpu_custom_call.1} parent=1 // pred_check_branch
      %2725 = sbr.rel (0) target = $region37
    $region36: #{tpu_custom_call.1} parent=1 // pred_region
      %2727 = vsyncadd [#allocation4], 0
      %s2728 = sshll.u32 [#allocation8], 4
      %s2729 = int_to_ptr.vmem [resolvable:$true] %s2728
      %s2730 = sshll.u32 %s5, 4
      %s2731 = int_to_ptr.hbm [resolvable:$true] %s2730
      %2736 = dma.vmem_to_hbm [thread:$0]  %s2729, 4096, %s2731, [#allocation4], 128, 128, 8
    $region37: #{tpu_custom_call.1} parent=1 // pred_fallthru
      _
    // Predicated region
    $region38: #{tpu_custom_call.1} parent=1 // pred_check
      _
    $region39: #{tpu_custom_call.1} parent=1 // pred_check_branch
      %2738 = sbr.rel (0) target = $region41
    $region40: #{tpu_custom_call.1} parent=1 // pred_region
      %2740 = dma.done [#allocation4], 4096
    $region41: #{tpu_custom_call.1} parent=1 // pred_fallthru
      _
    %2741 = vsyncpa [#allocation3], 1
    %2742 = vsyncpa [#allocation6], 1
    %2743 = vsyncpa [#allocation4], 1

</llo_original>
